<compile_context>
chip_gen: v5e
topology: v5e:2x2
jax: 0.10.0
libtpu: 0.0.40
codegen_flags: <defaults>
</compile_context>

<pallas_src>
import functools
import math

import jax
import jax.numpy as jnp
from jax.experimental import pallas as pl
from jax.experimental.pallas import tpu as pltpu


_VMEM_LIMIT = 32 * 1024 * 1024     # fits inside v5e/v6e 128 MiB and v7x 64 MiB physical VMEM
_FUSE_BUDGET = 12 * 1024 * 1024    # per-sample working-set cap for the fully fused path


# ---------------------------------------------------------------------------
# Pallas kernels
# ---------------------------------------------------------------------------
def _fused_stage_kernel(x_ref, w_ref, b_ref, g_ref, be_ref, o_ref, *, num_groups, eps):
    """One sample per grid step: conv + bias + GroupNorm + SiLU fully fused.

    x_ref  : (1, K, HW)    bf16  channel-major im2col (K = 9*Cin), spatial on lanes
    w_ref  : (Cout, K)     bf16  packed conv weight
    b_ref  : (Cout, 1)     f32   conv bias
    g_ref  : (Cout, 1)     f32   GroupNorm gamma
    be_ref : (Cout, 1)     f32   GroupNorm beta
    o_ref  : (1, Cout, HW) f32   activation (channel-major -> NCHW reshape is free)
    """
    # Single lane-dense MXU matmul, f32 accumulation, (Cout, HW) orientation.
    acc = jnp.dot(w_ref[...], x_ref[0], preferred_element_type=jnp.float32)
    acc = acc + b_ref[...]                                     # (Cout, HW)

    cout, hw = acc.shape
    cg = cout // num_groups
    inv_cnt = 1.0 / float(cg * hw)

    # Two-pass (mean-subtracted) GroupNorm statistics in f32 -- no cancellation issue.
    gacc = acc.reshape(num_groups, cg, hw)
    mean = jnp.sum(jnp.sum(gacc, axis=2, keepdims=True), axis=1, keepdims=True) * inv_cnt
    diff = gacc - mean
    var = jnp.sum(jnp.sum(diff * diff, axis=2, keepdims=True), axis=1, keepdims=True) * inv_cnt
    inv = jax.lax.rsqrt(var + eps)
    yn = (diff * inv).reshape(cout, hw)

    y = yn * g_ref[...] + be_ref[...]
    sig = pl.reciprocal(1.0 + jnp.exp(-y), approx=True)        # EUP, not a VPU divide
    o_ref[0] = y * sig


def _conv_stats_kernel(x_ref, w_ref, b_ref, o_ref, st_ref):
    """Large-image fallback: row-tiled conv + per-tile GroupNorm partial statistics.

    Stats are per-tile partials (no cross-tile accumulation), so both grid axes are
    'parallel' and v7x megacore can split row tiles across TensorCores.
    """
    acc = jnp.dot(w_ref[...], x_ref[0], preferred_element_type=jnp.float32)
    acc = acc + b_ref[...]                                     # (Cout, tm) lane-dense
    o_ref[0] = acc
    st_ref[0, 0, :, 0:1] = jnp.sum(acc, axis=-1, keepdims=True)
    st_ref[0, 0, :, 1:2] = jnp.sum(acc * acc, axis=-1, keepdims=True)


def _norm_silu_kernel(x_ref, scale_ref, shift_ref, o_ref):
    """GroupNorm affine (precomputed per-channel scale/shift) + SiLU, lane-dense over HW."""
    y = x_ref[0] * scale_ref[0] + shift_ref[0]                 # (C, 1) broadcasts along lanes
    o_ref[0] = y * pl.reciprocal(1.0 + jnp.exp(-y), approx=True)


# ---------------------------------------------------------------------------
# Host-side layout glue (plain XLA, cheap and fusible)
# ---------------------------------------------------------------------------
def _im2col_stride2(x):
    """(N, Cin, H, W) -> channel-major stride-2 3x3 im2col (N, 9*Cin, Ho*Wo).

    K ordering is (cin, ki*3+kj) so the weight flatten (Cout, Cin*9) matches exactly.
    ~2.25x input traffic; makes the kernel operand MXU-ready with zero in-kernel
    reshapes/relayouts.
    """
    # TODO(synk): for very large images an in-kernel halo DMA gather (pl.ANY +
    # make_async_copy) would avoid materializing the 2.25x im2col array in HBM.
    n, c, h, w = x.shape
    assert h % 2 == 0 and w % 2 == 0, "spatial dims must be even for stride-2 downsample"
    ho, wo = h // 2, w // 2
    xp = jnp.pad(x, ((0, 0), (0, 0), (1, 1), (1, 1)))
    taps = [xp[:, :, ki:ki + 2 * ho:2, kj:kj + 2 * wo:2]       # 9 x (N, Cin, Ho, Wo)
            for ki in range(3) for kj in range(3)]
    xcol = jnp.stack(taps, axis=2)                             # (N, Cin, 9, Ho, Wo)
    return xcol.reshape(n, c * 9, ho * wo), (ho, wo)


def _pick_lane_tile(hw, col_bytes, budget=8 * 1024 * 1024):
    """Largest multiple of 128 dividing hw within the byte budget.

    Falls back to the full extent for tiny stages (hw < 128): legal (block dim equals
    the full array dim) but intentionally lane-sparse -- absolute cost is negligible.
    """
    best = None
    t = 128
    while t <= hw:
        if hw % t == 0 and t * col_bytes <= budget:
            best = t
        t += 128
    return best if best is not None else hw


def _fused_bytes(k, hw, cout):
    x_blk = k * hw * 2                  # bf16 input block
    o_blk = cout * hw * 4               # f32 output block
    w_blk = cout * k * 2
    work = 4 * cout * hw * 4            # acc + GN temporaries (f32)
    return 2 * (x_blk + o_blk) + w_blk + work


# ---------------------------------------------------------------------------
# Stage wrappers
# ---------------------------------------------------------------------------
def _fused_stage(xcol, wcol, bias, gamma, beta, num_groups, eps):
    n, k, hw = xcol.shape
    cout = wcol.shape[0]
    kernel = functools.partial(_fused_stage_kernel, num_groups=num_groups, eps=eps)
    return pl.pallas_call(
        kernel,
        out_shape=jax.ShapeDtypeStruct((n, cout, hw), jnp.float32),
        grid=(n,),
        in_specs=[
            pl.BlockSpec((1, k, hw), lambda i: (i, 0, 0)),
            pl.BlockSpec((cout, k), lambda i: (0, 0)),
            pl.BlockSpec((cout, 1), lambda i: (0, 0)),
            pl.BlockSpec((cout, 1), lambda i: (0, 0)),
            pl.BlockSpec((cout, 1), lambda i: (0, 0)),
        ],
        out_specs=pl.BlockSpec((1, cout, hw), lambda i: (i, 0, 0)),
        compiler_params=pltpu.CompilerParams(
            dimension_semantics=("parallel",),       # batch across cores (v7x megacore)
            vmem_limit_bytes=_VMEM_LIMIT,
        ),
    )(xcol, wcol, bias, gamma, beta)


def _conv_stats_stage(xcol, wcol, bias):
    n, k, hw = xcol.shape
    cout = wcol.shape[0]
    col_bytes = 2 * (k * 2) + 3 * (cout * 4)         # ~x block + out block + acc per column
    tm = _pick_lane_tile(hw, col_bytes)
    r = hw // tm
    act, stats = pl.pallas_call(
        _conv_stats_kernel,
        out_shape=(jax.ShapeDtypeStruct((n, cout, hw), jnp.float32),
                   jax.ShapeDtypeStruct((n, r, cout, 2), jnp.float32)),
        grid=(n, r),
        in_specs=[
            # Row-tiled input (double-buffered by BlockSpec) -- no whole-sample VMEM residency.
            pl.BlockSpec((1, k, tm), lambda i, j: (i, 0, j)),
            pl.BlockSpec((cout, k), lambda i, j: (0, 0)),
            pl.BlockSpec((cout, 1), lambda i, j: (0, 0)),
        ],
        out_specs=(
            pl.BlockSpec((1, cout, tm), lambda i, j: (i, 0, j)),
            pl.BlockSpec((1, 1, cout, 2), lambda i, j: (i, j, 0, 0)),
        ),
        compiler_params=pltpu.CompilerParams(
            dimension_semantics=("parallel", "parallel"),   # per-tile partials -> rows splittable
            vmem_limit_bytes=_VMEM_LIMIT,
        ),
    )(xcol, wcol, bias)
    return act, stats


def _gn_scale_shift(stats, gamma, beta, hw, num_groups, eps):
    """Tiny O(N*C) host-side reduction: per-tile [sum, sumsq] -> per-channel scale/shift."""
    n, _, c, _ = stats.shape
    cg = c // num_groups
    tot = stats.sum(axis=1)                                   # (N, C, 2)
    gs1 = tot[..., 0].reshape(n, num_groups, cg).sum(axis=2)  # (N, G)
    gs2 = tot[..., 1].reshape(n, num_groups, cg).sum(axis=2)
    cnt = jnp.float32(hw * cg)
    mean = gs1 / cnt
    var = jnp.maximum(gs2 / cnt - mean * mean, 0.0)           # clamp cancellation
    inv = jax.lax.rsqrt(var + eps)
    mean_c = jnp.repeat(mean, cg, axis=1)                     # (N, C)
    inv_c = jnp.repeat(inv, cg, axis=1)
    scale = inv_c * gamma[None, :]
    shift = beta[None, :] - mean_c * scale
    return scale, shift


def _norm_silu_stage(act, scale, shift):
    n, c, hw = act.shape
    thw = _pick_lane_tile(hw, 4 * c * 4)
    return pl.pallas_call(
        _norm_silu_kernel,
        out_shape=jax.ShapeDtypeStruct((n, c, hw), jnp.float32),
        grid=(n, hw // thw),
        in_specs=[
            pl.BlockSpec((1, c, thw), lambda i, j: (i, 0, j)),
            pl.BlockSpec((1, c, 1), lambda i, j: (i, 0, 0)),
            pl.BlockSpec((1, c, 1), lambda i, j: (i, 0, 0)),
        ],
        out_specs=pl.BlockSpec((1, c, thw), lambda i, j: (i, 0, j)),
        compiler_params=pltpu.CompilerParams(
            dimension_semantics=("parallel", "parallel"),
            vmem_limit_bytes=_VMEM_LIMIT,
        ),
    )(act, scale.reshape(n, c, 1), shift.reshape(n, c, 1))


# ---------------------------------------------------------------------------
# Module: parameters + forward
# ---------------------------------------------------------------------------
def init_params(key, in_channels, out_channels, scale_factor):
    num_down = int(math.log2(scale_factor))
    params = []
    cur = in_channels
    for i in range(num_down):
        nxt = out_channels if i == num_down - 1 else cur * 2
        key, kw, kb, kg, ke = jax.random.split(key, 5)
        fan_in = cur * 9
        w = jax.random.normal(kw, (nxt, cur, 3, 3), jnp.float32) / jnp.sqrt(fan_in)
        b = jax.random.normal(kb, (nxt,), jnp.float32) * 0.05
        # (PyTorch default is gamma=1, beta=0; perturbed here so the affine path is tested.)
        gamma = 1.0 + 0.1 * jax.random.normal(kg, (nxt,), jnp.float32)
        beta = 0.1 * jax.random.normal(ke, (nxt,), jnp.float32)
        params.append({"w": w, "b": b, "gamma": gamma, "beta": beta})
        cur = nxt
    return params


def image_downsampler(x, params, num_groups=8, eps=1e-5, force_tiled=False):
    """Forward pass matching the PyTorch module (NCHW in, NCHW out)."""
    n = x.shape[0]
    for p in params:
        cout = p["w"].shape[0]
        assert cout % num_groups == 0
        xcol, (ho, wo) = _im2col_stride2(x)
        xcol = xcol.astype(jnp.bfloat16)                       # bf16 MXU operands
        wcol = p["w"].reshape(cout, -1).astype(jnp.bfloat16)   # (Cout, 9*Cin)
        b2 = p["b"].reshape(cout, 1).astype(jnp.float32)
        g2 = p["gamma"].reshape(cout, 1).astype(jnp.float32)
        be2 = p["beta"].reshape(cout, 1).astype(jnp.float32)
        k, hw = xcol.shape[1], xcol.shape[2]

        if (not force_tiled) and _fused_bytes(k, hw, cout) <= _FUSE_BUDGET:
            # Whole stage in one pallas_call: one launch, one HBM write per stage.
            act = _fused_stage(xcol, wcol, b2, g2, be2, num_groups, eps)
        else:
            # Large-image fallback: row-tiled conv + partial stats, host group reduce,
            # then lane-dense normalize + SiLU.
            act, stats = _conv_stats_stage(xcol, wcol, b2)
            scale, shift = _gn_scale_shift(stats, p["gamma"], p["beta"], hw, num_groups, eps)
            act = _norm_silu_stage(act, scale, shift)

        x = act.reshape(n, cout, ho, wo)                       # channel-major -> NCHW for free
    return x


# ---------------------------------------------------------------------------
# Pure-JAX reference (same bf16 conv-input precision as the kernel path)
# ---------------------------------------------------------------------------
def _reference(x, params, num_groups=8, eps=1e-5):
    for p in params:
        xq = x.astype(jnp.bfloat16).astype(jnp.float32)
        wq = p["w"].astype(jnp.bfloat16).astype(jnp.float32)
        y = jax.lax.conv_general_dilated(
            xq, wq, window_strides=(2, 2), padding=[(1, 1), (1, 1)],
            dimension_numbers=("NCHW", "OIHW", "NCHW"))
        y = y + p["b"][None, :, None, None]
        n, c, h, w = y.shape
        cg = c // num_groups
        yg = y.reshape(n, num_groups, cg, h, w)
        mean = yg.mean(axis=(2, 3, 4), keepdims=True)
        var = ((yg - mean) ** 2).mean(axis=(2, 3, 4), keepdims=True)
        yg = (yg - mean) * jax.lax.rsqrt(var + eps)
        y = yg.reshape(n, c, h, w) * p["gamma"][None, :, None, None] \
            + p["beta"][None, :, None, None]
        x = y * jax.nn.sigmoid(y)
    return x


if __name__ == "__main__":
    key = jax.random.PRNGKey(0)
    kx, kp = jax.random.split(key)

    # spatial_dims=2, in_channels=8, out_channels=32, scale_factor=4 -> 2 downsample stages
    in_channels, out_channels, scale_factor = 8, 32, 4
    x = jax.random.normal(kx, (2, in_channels, 32, 32), jnp.float32)   # NCHW
    params = init_params(kp, in_channels, out_channels, scale_factor)

    ref = jax.block_until_ready(_reference(x, params))

    # Fused single-call path (the one used at these sizes).
    fwd = jax.jit(image_downsampler)
    out = jax.block_until_ready(fwd(x, params))
    assert out.shape == (2, out_channels, 32 // scale_factor, 32 // scale_factor), out.shape
    err = float(jnp.max(jnp.abs(out - ref)))
    assert err < 2e-2, err    # bf16 MXU operands + approx-reciprocal sigmoid vs f32 reference

    # Also exercise the large-image tiled fallback path on the same input.
    fwd_tiled = jax.jit(functools.partial(image_downsampler, force_tiled=True))
    out_t = jax.block_until_ready(fwd_tiled(x, params))
    err_t = float(jnp.max(jnp.abs(out_t - ref)))
    assert err_t < 2e-2, err_t

    print("KERNEL_OK")
</pallas_src>

<mosaic_0001>
module attributes {stable_mosaic.version = 11 : i64} {
  func.func @_fused_stage_kernel(%arg0: i32, %arg1: memref<1x72x256xbf16, #tpu.memory_space<vmem>>, %arg2: memref<16x72xbf16, #tpu.memory_space<vmem>>, %arg3: memref<16x1xf32, #tpu.memory_space<vmem>>, %arg4: memref<16x1xf32, #tpu.memory_space<vmem>>, %arg5: memref<16x1xf32, #tpu.memory_space<vmem>>, %arg6: memref<1x16x256xf32, #tpu.memory_space<vmem>>) attributes {dimension_semantics = [#tpu.dimension_semantics<parallel>], iteration_bounds = array<i64: 2>, scalar_prefetch = 0 : i64, scratch_operands = 0 : i64, tpu.core_type = #tpu.core_type<tc>, window_params = [{transform_indices = @transform_0, window_bounds = array<i64: 1, 72, 256>}, {pipeline_mode = #tpu.pipeline_mode<synchronous>, transform_indices = @transform_1, window_bounds = array<i64: 16, 72>}, {pipeline_mode = #tpu.pipeline_mode<synchronous>, transform_indices = @transform_2, window_bounds = array<i64: 16, 1>}, {pipeline_mode = #tpu.pipeline_mode<synchronous>, transform_indices = @transform_3, window_bounds = array<i64: 16, 1>}, {pipeline_mode = #tpu.pipeline_mode<synchronous>, transform_indices = @transform_4, window_bounds = array<i64: 16, 1>}, {transform_indices = @transform_5, window_bounds = array<i64: 1, 16, 256>}]} {
    %c0 = arith.constant 0 : index
    %c0_0 = arith.constant 0 : index
    %0 = vector.load %arg2[%c0, %c0_0] : memref<16x72xbf16, #tpu.memory_space<vmem>>, vector<16x72xbf16>
    %c0_1 = arith.constant 0 : index
    %c0_2 = arith.constant 0 : index
    %c0_3 = arith.constant 0 : index
    %1 = vector.load %arg1[%c0_1, %c0_2, %c0_3] : memref<1x72x256xbf16, #tpu.memory_space<vmem>>, vector<1x72x256xbf16>
    %2 = vector.shape_cast %1 : vector<1x72x256xbf16> to vector<72x256xbf16>
    %cst = arith.constant dense<0.000000e+00> : vector<16x256xf32>
    %3 = tpu.matmul %0, %2, %cst {dimension_numbers = #tpu.dot_dimension_numbers<[1], [0], [0], [1], [0, 0, 1, 1], [], []>} : vector<16x72xbf16>, vector<72x256xbf16>, vector<16x256xf32> -> vector<16x256xf32>
    %c0_4 = arith.constant 0 : index
    %c0_5 = arith.constant 0 : index
    %4 = vector.load %arg3[%c0_4, %c0_5] : memref<16x1xf32, #tpu.memory_space<vmem>>, vector<16x1xf32>
    %5 = vector.broadcast %4 : vector<16x1xf32> to vector<16x256xf32>
    %6 = arith.addf %3, %5 : vector<16x256xf32>
    %7 = vector.shape_cast %6 : vector<16x256xf32> to vector<8x2x256xf32>
    %cst_6 = arith.constant dense<0.000000e+00> : vector<8x2xf32>
    %8 = vector.multi_reduction <add>, %7, %cst_6 [2] : vector<8x2x256xf32> to vector<8x2xf32>
    %9 = vector.shape_cast %8 : vector<8x2xf32> to vector<8x2x1xf32>
    %cst_7 = arith.constant dense<0.000000e+00> : vector<8x1xf32>
    %10 = vector.multi_reduction <add>, %9, %cst_7 [1] : vector<8x2x1xf32> to vector<8x1xf32>
    %11 = vector.shape_cast %10 : vector<8x1xf32> to vector<8x1x1xf32>
    %cst_8 = arith.constant 0.001953125 : f32
    %12 = vector.broadcast %cst_8 : f32 to vector<8x1x1xf32>
    %13 = arith.mulf %11, %12 : vector<8x1x1xf32>
    %14 = vector.broadcast %13 : vector<8x1x1xf32> to vector<8x2x256xf32>
    %15 = arith.subf %7, %14 : vector<8x2x256xf32>
    %16 = arith.mulf %15, %15 : vector<8x2x256xf32>
    %cst_9 = arith.constant dense<0.000000e+00> : vector<8x2xf32>
    %17 = vector.multi_reduction <add>, %16, %cst_9 [2] : vector<8x2x256xf32> to vector<8x2xf32>
    %18 = vector.shape_cast %17 : vector<8x2xf32> to vector<8x2x1xf32>
    %cst_10 = arith.constant dense<0.000000e+00> : vector<8x1xf32>
    %19 = vector.multi_reduction <add>, %18, %cst_10 [1] : vector<8x2x1xf32> to vector<8x1xf32>
    %20 = vector.shape_cast %19 : vector<8x1xf32> to vector<8x1x1xf32>
    %cst_11 = arith.constant 0.001953125 : f32
    %21 = vector.broadcast %cst_11 : f32 to vector<8x1x1xf32>
    %22 = arith.mulf %20, %21 : vector<8x1x1xf32>
    %cst_12 = arith.constant 9.99999974E-6 : f32
    %23 = vector.broadcast %cst_12 : f32 to vector<8x1x1xf32>
    %24 = arith.addf %22, %23 : vector<8x1x1xf32>
    %25 = math.rsqrt %24 : vector<8x1x1xf32>
    %26 = vector.broadcast %25 : vector<8x1x1xf32> to vector<8x2x256xf32>
    %27 = arith.mulf %15, %26 : vector<8x2x256xf32>
    %28 = vector.shape_cast %27 : vector<8x2x256xf32> to vector<16x256xf32>
    %c0_13 = arith.constant 0 : index
    %c0_14 = arith.constant 0 : index
    %29 = vector.load %arg4[%c0_13, %c0_14] : memref<16x1xf32, #tpu.memory_space<vmem>>, vector<16x1xf32>
    %30 = vector.broadcast %29 : vector<16x1xf32> to vector<16x256xf32>
    %31 = arith.mulf %28, %30 : vector<16x256xf32>
    %c0_15 = arith.constant 0 : index
    %c0_16 = arith.constant 0 : index
    %32 = vector.load %arg5[%c0_15, %c0_16] : memref<16x1xf32, #tpu.memory_space<vmem>>, vector<16x1xf32>
    %33 = vector.broadcast %32 : vector<16x1xf32> to vector<16x256xf32>
    %34 = arith.addf %31, %33 : vector<16x256xf32>
    %cst_17 = arith.constant 0.000000e+00 : f32
    %35 = vector.broadcast %cst_17 : f32 to vector<16x256xf32>
    %36 = arith.subf %35, %34 : vector<16x256xf32>
    %37 = math.exp %36 : vector<16x256xf32>
    %cst_18 = arith.constant 1.000000e+00 : f32
    %38 = vector.broadcast %cst_18 : f32 to vector<16x256xf32>
    %39 = arith.addf %38, %37 : vector<16x256xf32>
    %40 = tpu.reciprocal %39 {approx = true} : vector<16x256xf32> -> vector<16x256xf32>
    %41 = arith.mulf %34, %40 : vector<16x256xf32>
    %c0_19 = arith.constant 0 : index
    %c0_20 = arith.constant 0 : index
    %c0_21 = arith.constant 0 : index
    %42 = vector.load %arg6[%c0_19, %c0_20, %c0_21] : memref<1x16x256xf32, #tpu.memory_space<vmem>>, vector<1x16x256xf32>
    %43 = vector.shape_cast %42 : vector<1x16x256xf32> to vector<16x256xf32>
    %44 = vector.shape_cast %41 : vector<16x256xf32> to vector<1x16x256xf32>
    tpu.vector_store %arg6[%c0_19, %c0_20, %c0_21], %44 {strides = array<i32>} : memref<1x16x256xf32, #tpu.memory_space<vmem>>, vector<1x16x256xf32>,
    return
  }
  func.func @transform_0(%arg0: i32) -> (i32, i32, i32) {
    %c0_i32 = arith.constant 0 : i32
    %c0_i32_0 = arith.constant 0 : i32
    %c0_i32_1 = arith.constant 0 : i32
    return %arg0, %c0_i32, %c0_i32_0 : i32, i32, i32
  }
  func.func @transform_1(%arg0: i32) -> (i32, i32) {
    %c0_i32 = arith.constant 0 : i32
    %c0_i32_0 = arith.constant 0 : i32
    %c0_i32_1 = arith.constant 0 : i32
    return %c0_i32, %c0_i32_0 : i32, i32
  }
  func.func @transform_2(%arg0: i32) -> (i32, i32) {
    %c0_i32 = arith.constant 0 : i32
    %c0_i32_0 = arith.constant 0 : i32
    %c0_i32_1 = arith.constant 0 : i32
    return %c0_i32, %c0_i32_0 : i32, i32
  }
  func.func @transform_3(%arg0: i32) -> (i32, i32) {
    %c0_i32 = arith.constant 0 : i32
    %c0_i32_0 = arith.constant 0 : i32
    %c0_i32_1 = arith.constant 0 : i32
    return %c0_i32, %c0_i32_0 : i32, i32
  }
  func.func @transform_4(%arg0: i32) -> (i32, i32) {
    %c0_i32 = arith.constant 0 : i32
    %c0_i32_0 = arith.constant 0 : i32
    %c0_i32_1 = arith.constant 0 : i32
    return %c0_i32, %c0_i32_0 : i32, i32
  }
  func.func @transform_5(%arg0: i32) -> (i32, i32, i32) {
    %c0_i32 = arith.constant 0 : i32
    %c0_i32_0 = arith.constant 0 : i32
    %c0_i32_1 = arith.constant 0 : i32
    return %arg0, %c0_i32, %c0_i32_0 : i32, i32, i32
  }
}

module attributes {stable_mosaic.version = 11 : i64} {
  func.func @_fused_stage_kernel(%arg0: i32, %arg1: memref<1x144x64xbf16, #tpu.memory_space<vmem>>, %arg2: memref<32x144xbf16, #tpu.memory_space<vmem>>, %arg3: memref<32x1xf32, #tpu.memory_space<vmem>>, %arg4: memref<32x1xf32, #tpu.memory_space<vmem>>, %arg5: memref<32x1xf32, #tpu.memory_space<vmem>>, %arg6: memref<1x32x64xf32, #tpu.memory_space<vmem>>) attributes {dimension_semantics = [#tpu.dimension_semantics<parallel>], iteration_bounds = array<i64: 2>, scalar_prefetch = 0 : i64, scratch_operands = 0 : i64, tpu.core_type = #tpu.core_type<tc>, window_params = [{transform_indices = @transform_0, window_bounds = array<i64: 1, 144, 64>}, {pipeline_mode = #tpu.pipeline_mode<synchronous>, transform_indices = @transform_1, window_bounds = array<i64: 32, 144>}, {pipeline_mode = #tpu.pipeline_mode<synchronous>, transform_indices = @transform_2, window_bounds = array<i64: 32, 1>}, {pipeline_mode = #tpu.pipeline_mode<synchronous>, transform_indices = @transform_3, window_bounds = array<i64: 32, 1>}, {pipeline_mode = #tpu.pipeline_mode<synchronous>, transform_indices = @transform_4, window_bounds = array<i64: 32, 1>}, {transform_indices = @transform_5, window_bounds = array<i64: 1, 32, 64>}]} {
    %c0 = arith.constant 0 : index
    %c0_0 = arith.constant 0 : index
    %0 = vector.load %arg2[%c0, %c0_0] : memref<32x144xbf16, #tpu.memory_space<vmem>>, vector<32x144xbf16>
    %c0_1 = arith.constant 0 : index
    %c0_2 = arith.constant 0 : index
    %c0_3 = arith.constant 0 : index
    %1 = vector.load %arg1[%c0_1, %c0_2, %c0_3] : memref<1x144x64xbf16, #tpu.memory_space<vmem>>, vector<1x144x64xbf16>
    %2 = vector.shape_cast %1 : vector<1x144x64xbf16> to vector<144x64xbf16>
    %cst = arith.constant dense<0.000000e+00> : vector<32x64xf32>
    %3 = tpu.matmul %0, %2, %cst {dimension_numbers = #tpu.dot_dimension_numbers<[1], [0], [0], [1], [0, 0, 1, 1], [], []>} : vector<32x144xbf16>, vector<144x64xbf16>, vector<32x64xf32> -> vector<32x64xf32>
    %c0_4 = arith.constant 0 : index
    %c0_5 = arith.constant 0 : index
    %4 = vector.load %arg3[%c0_4, %c0_5] : memref<32x1xf32, #tpu.memory_space<vmem>>, vector<32x1xf32>
    %5 = vector.broadcast %4 : vector<32x1xf32> to vector<32x64xf32>
    %6 = arith.addf %3, %5 : vector<32x64xf32>
    %7 = vector.shape_cast %6 : vector<32x64xf32> to vector<8x4x64xf32>
    %cst_6 = arith.constant dense<0.000000e+00> : vector<8x4xf32>
    %8 = vector.multi_reduction <add>, %7, %cst_6 [2] : vector<8x4x64xf32> to vector<8x4xf32>
    %9 = vector.shape_cast %8 : vector<8x4xf32> to vector<8x4x1xf32>
    %cst_7 = arith.constant dense<0.000000e+00> : vector<8x1xf32>
    %10 = vector.multi_reduction <add>, %9, %cst_7 [1] : vector<8x4x1xf32> to vector<8x1xf32>
    %11 = vector.shape_cast %10 : vector<8x1xf32> to vector<8x1x1xf32>
    %cst_8 = arith.constant 3.906250e-03 : f32
    %12 = vector.broadcast %cst_8 : f32 to vector<8x1x1xf32>
    %13 = arith.mulf %11, %12 : vector<8x1x1xf32>
    %14 = vector.broadcast %13 : vector<8x1x1xf32> to vector<8x4x64xf32>
    %15 = arith.subf %7, %14 : vector<8x4x64xf32>
    %16 = arith.mulf %15, %15 : vector<8x4x64xf32>
    %cst_9 = arith.constant dense<0.000000e+00> : vector<8x4xf32>
    %17 = vector.multi_reduction <add>, %16, %cst_9 [2] : vector<8x4x64xf32> to vector<8x4xf32>
    %18 = vector.shape_cast %17 : vector<8x4xf32> to vector<8x4x1xf32>
    %cst_10 = arith.constant dense<0.000000e+00> : vector<8x1xf32>
    %19 = vector.multi_reduction <add>, %18, %cst_10 [1] : vector<8x4x1xf32> to vector<8x1xf32>
    %20 = vector.shape_cast %19 : vector<8x1xf32> to vector<8x1x1xf32>
    %cst_11 = arith.constant 3.906250e-03 : f32
    %21 = vector.broadcast %cst_11 : f32 to vector<8x1x1xf32>
    %22 = arith.mulf %20, %21 : vector<8x1x1xf32>
    %cst_12 = arith.constant 9.99999974E-6 : f32
    %23 = vector.broadcast %cst_12 : f32 to vector<8x1x1xf32>
    %24 = arith.addf %22, %23 : vector<8x1x1xf32>
    %25 = math.rsqrt %24 : vector<8x1x1xf32>
    %26 = vector.broadcast %25 : vector<8x1x1xf32> to vector<8x4x64xf32>
    %27 = arith.mulf %15, %26 : vector<8x4x64xf32>
    %28 = vector.shape_cast %27 : vector<8x4x64xf32> to vector<32x64xf32>
    %c0_13 = arith.constant 0 : index
    %c0_14 = arith.constant 0 : index
    %29 = vector.load %arg4[%c0_13, %c0_14] : memref<32x1xf32, #tpu.memory_space<vmem>>, vector<32x1xf32>
    %30 = vector.broadcast %29 : vector<32x1xf32> to vector<32x64xf32>
    %31 = arith.mulf %28, %30 : vector<32x64xf32>
    %c0_15 = arith.constant 0 : index
    %c0_16 = arith.constant 0 : index
    %32 = vector.load %arg5[%c0_15, %c0_16] : memref<32x1xf32, #tpu.memory_space<vmem>>, vector<32x1xf32>
    %33 = vector.broadcast %32 : vector<32x1xf32> to vector<32x64xf32>
    %34 = arith.addf %31, %33 : vector<32x64xf32>
    %cst_17 = arith.constant 0.000000e+00 : f32
    %35 = vector.broadcast %cst_17 : f32 to vector<32x64xf32>
    %36 = arith.subf %35, %34 : vector<32x64xf32>
    %37 = math.exp %36 : vector<32x64xf32>
    %cst_18 = arith.constant 1.000000e+00 : f32
    %38 = vector.broadcast %cst_18 : f32 to vector<32x64xf32>
    %39 = arith.addf %38, %37 : vector<32x64xf32>
    %40 = tpu.reciprocal %39 {approx = true} : vector<32x64xf32> -> vector<32x64xf32>
    %41 = arith.mulf %34, %40 : vector<32x64xf32>
    %c0_19 = arith.constant 0 : index
    %c0_20 = arith.constant 0 : index
    %c0_21 = arith.constant 0 : index
    %42 = vector.load %arg6[%c0_19, %c0_20, %c0_21] : memref<1x32x64xf32, #tpu.memory_space<vmem>>, vector<1x32x64xf32>
    %43 = vector.shape_cast %42 : vector<1x32x64xf32> to vector<32x64xf32>
    %44 = vector.shape_cast %41 : vector<32x64xf32> to vector<1x32x64xf32>
    tpu.vector_store %arg6[%c0_19, %c0_20, %c0_21], %44 {strides = array<i32>} : memref<1x32x64xf32, #tpu.memory_space<vmem>>, vector<1x32x64xf32>,
    return
  }
  func.func @transform_0(%arg0: i32) -> (i32, i32, i32) {
    %c0_i32 = arith.constant 0 : i32
    %c0_i32_0 = arith.constant 0 : i32
    %c0_i32_1 = arith.constant 0 : i32
    return %arg0, %c0_i32, %c0_i32_0 : i32, i32, i32
  }
  func.func @transform_1(%arg0: i32) -> (i32, i32) {
    %c0_i32 = arith.constant 0 : i32
    %c0_i32_0 = arith.constant 0 : i32
    %c0_i32_1 = arith.constant 0 : i32
    return %c0_i32, %c0_i32_0 : i32, i32
  }
  func.func @transform_2(%arg0: i32) -> (i32, i32) {
    %c0_i32 = arith.constant 0 : i32
    %c0_i32_0 = arith.constant 0 : i32
    %c0_i32_1 = arith.constant 0 : i32
    return %c0_i32, %c0_i32_0 : i32, i32
  }
  func.func @transform_3(%arg0: i32) -> (i32, i32) {
    %c0_i32 = arith.constant 0 : i32
    %c0_i32_0 = arith.constant 0 : i32
    %c0_i32_1 = arith.constant 0 : i32
    return %c0_i32, %c0_i32_0 : i32, i32
  }
  func.func @transform_4(%arg0: i32) -> (i32, i32) {
    %c0_i32 = arith.constant 0 : i32
    %c0_i32_0 = arith.constant 0 : i32
    %c0_i32_1 = arith.constant 0 : i32
    return %c0_i32, %c0_i32_0 : i32, i32
  }
  func.func @transform_5(%arg0: i32) -> (i32, i32, i32) {
    %c0_i32 = arith.constant 0 : i32
    %c0_i32_0 = arith.constant 0 : i32
    %c0_i32_1 = arith.constant 0 : i32
    return %arg0, %c0_i32, %c0_i32_0 : i32, i32, i32
  }
}

</mosaic_0001>

<llo_original>
// kernel: image_downsampler.2
$region0: #{image_downsampler.2}
  #allocation0 [shape = 'u32[]', space=smem, size = 0x4, offset = 0x4, fixed_abs, tag = 'smem constant byte address 0x4 - core index']
  #allocation1 [shape = 'u32[72,128]{1,0:T(1,128)}', space=vmem, size = 0x9000, scoped, tag = 'internal scratch']
  %s0 = inlined_call_operand.vmem [shape: bf16[2,72,256], index: 0, kind: input, shape index: {}]
  %s1 = inlined_call_operand.vmem [shape: bf16[16,72], index: 1, kind: input, shape index: {}]
  %s2 = inlined_call_operand.vmem [shape: f32[16,1], index: 2, kind: input, shape index: {}]
  %s3 = inlined_call_operand.vmem [shape: f32[16,1], index: 3, kind: input, shape index: {}]
  %s4 = inlined_call_operand.vmem [shape: f32[16,1], index: 4, kind: input, shape index: {}]
  %s5 = inlined_call_operand.vmem [shape: f32[2,16,256], index: 5, kind: output, shape index: {}]
  %s6 = sld [smem:[#allocation0]]
  $region53: #{image_downsampler.2} parent=0
    _
  %s8 = ssub.s32 1, %s6
  %s9 = scalar_select 0, %s8, %s6
  loop: start=0, step=1, limit=4
  $region2: #{image_downsampler.2} parent=0 // loop_pre_header
    _
  $region3: #{image_downsampler.2} parent=0 // loop_header
    %s11 = sphi 0, %s15
    %p12 = scmp.ge.s32.totalorder %s11, 4
    %s21 = sphi 0, %s23
    %s24 = sphi 0, %s21
    %s25 = sphi 0, %s24
    %s41 = sphi 0, %s25
    %s45 = sphi 0, %s45
    %s47 = sphi 0, %s45
    %s48 = sphi 0, %s47
    %s62 = sphi 0, %s48
    %s66 = sphi 0, %s66
    %s68 = sphi 0, %s66
    %s69 = sphi 0, %s68
    %s83 = sphi 0, %s69
    %s87 = sphi 0, %s87
    %s89 = sphi 0, %s87
    %s90 = sphi 0, %s89
    %s104 = sphi 0, %s90
    %s108 = sphi 0, %s108
    %s110 = sphi 0, %s108
    %s111 = sphi 0, %s110
    %s125 = sphi 0, %s111
    %s131 = sphi 0, %s133
    %s134 = sphi 0, %s131
    %s135 = sphi 0, %s134
    %s151 = sphi 0, %s135
  $region4: #{image_downsampler.2} parent=0 // loop_header_branch
    %14 = sbr.rel (%p12) target = $region8
  $region5: #{image_downsampler.2} parent=0 // loop_body
    %s16 = ssub.s32 %s11, 1
    %s17 = ssub.s32 %s11, 2
    %s18 = sadd.s32 %s11, 1
    %s19 = ssub.s32 %s11, %s18
    %p20 = scmp.eq.s32.totalorder %s19, 0
    %s22 = sadd.s32 %s21, 1
    %s23 = scalar_select %p20, %s21, %s22
    %p26 = pneg %p20
    %p27 = scmp.eq.s32.totalorder %s11, 1
    %p28 = por %p26, %p27
    %p29 = scmp.ne.s32.totalorder %s21, %s24
    %p30 = scmp.eq.s32.totalorder %s11, 0
    %p31 = por %p29, %p30
    %p32 = scmp.ne.s32.totalorder %s21, %s24
    %p33 = scmp.eq.s32.totalorder %s16, 1
    %p34 = por %p32, %p33
    %p35 = scmp.ne.s32.totalorder %s24, %s25
    %p36 = scmp.eq.s32.totalorder %s16, 0
    %p37 = por %p35, %p36
    %p38 = scmp.ne.s32.totalorder %s24, %s25
    %p39 = scmp.eq.s32.totalorder %s17, 1
    %p40 = por %p38, %p39
    %p42 = scmp.ne.s32.totalorder %s25, %s41
    %p43 = scmp.eq.s32.totalorder %s17, 0
    %p44 = por %p42, %p43
    %s46 = sadd.s32 %s45, 1
    %p49 = scmp.eq.s32.totalorder %s11, 1
    %p50 = scmp.ne.s32.totalorder %s45, %s47
    %p51 = scmp.eq.s32.totalorder %s11, 0
    %p52 = por %p50, %p51
    %p53 = scmp.ne.s32.totalorder %s45, %s47
    %p54 = scmp.eq.s32.totalorder %s16, 1
    %p55 = por %p53, %p54
    %p56 = scmp.ne.s32.totalorder %s47, %s48
    %p57 = scmp.eq.s32.totalorder %s16, 0
    %p58 = por %p56, %p57
    %p59 = scmp.ne.s32.totalorder %s47, %s48
    %p60 = scmp.eq.s32.totalorder %s17, 1
    %p61 = por %p59, %p60
    %p63 = scmp.ne.s32.totalorder %s48, %s62
    %p64 = scmp.eq.s32.totalorder %s17, 0
    %p65 = por %p63, %p64
    %s67 = sadd.s32 %s66, 1
    %p70 = scmp.eq.s32.totalorder %s11, 1
    %p71 = scmp.ne.s32.totalorder %s66, %s68
    %p72 = scmp.eq.s32.totalorder %s11, 0
    %p73 = por %p71, %p72
    %p74 = scmp.ne.s32.totalorder %s66, %s68
    %p75 = scmp.eq.s32.totalorder %s16, 1
    %p76 = por %p74, %p75
    %p77 = scmp.ne.s32.totalorder %s68, %s69
    %p78 = scmp.eq.s32.totalorder %s16, 0
    %p79 = por %p77, %p78
    %p80 = scmp.ne.s32.totalorder %s68, %s69
    %p81 = scmp.eq.s32.totalorder %s17, 1
    %p82 = por %p80, %p81
    %p84 = scmp.ne.s32.totalorder %s69, %s83
    %p85 = scmp.eq.s32.totalorder %s17, 0
    %p86 = por %p84, %p85
    %s88 = sadd.s32 %s87, 1
    %p91 = scmp.eq.s32.totalorder %s11, 1
    %p92 = scmp.ne.s32.totalorder %s87, %s89
    %p93 = scmp.eq.s32.totalorder %s11, 0
    %p94 = por %p92, %p93
    %p95 = scmp.ne.s32.totalorder %s87, %s89
    %p96 = scmp.eq.s32.totalorder %s16, 1
    %p97 = por %p95, %p96
    %p98 = scmp.ne.s32.totalorder %s89, %s90
    %p99 = scmp.eq.s32.totalorder %s16, 0
    %p100 = por %p98, %p99
    %p101 = scmp.ne.s32.totalorder %s89, %s90
    %p102 = scmp.eq.s32.totalorder %s17, 1
    %p103 = por %p101, %p102
    %p105 = scmp.ne.s32.totalorder %s90, %s104
    %p106 = scmp.eq.s32.totalorder %s17, 0
    %p107 = por %p105, %p106
    %s109 = sadd.s32 %s108, 1
    %p112 = scmp.eq.s32.totalorder %s11, 1
    %p113 = scmp.ne.s32.totalorder %s108, %s110
    %p114 = scmp.eq.s32.totalorder %s11, 0
    %p115 = por %p113, %p114
    %p116 = scmp.ne.s32.totalorder %s108, %s110
    %p117 = scmp.eq.s32.totalorder %s16, 1
    %p118 = por %p116, %p117
    %p119 = scmp.ne.s32.totalorder %s110, %s111
    %p120 = scmp.eq.s32.totalorder %s16, 0
    %p121 = por %p119, %p120
    %p122 = scmp.ne.s32.totalorder %s110, %s111
    %p123 = scmp.eq.s32.totalorder %s17, 1
    %p124 = por %p122, %p123
    %p126 = scmp.ne.s32.totalorder %s111, %s125
    %p127 = scmp.eq.s32.totalorder %s17, 0
    %p128 = por %p126, %p127
    %s129 = ssub.s32 %s11, %s18
    %p130 = scmp.eq.s32.totalorder %s129, 0
    %s132 = sadd.s32 %s131, 1
    %s133 = scalar_select %p130, %s131, %s132
    %p136 = pneg %p130
    %p137 = scmp.eq.s32.totalorder %s11, 1
    %p138 = por %p136, %p137
    %p139 = scmp.ne.s32.totalorder %s131, %s134
    %p140 = scmp.eq.s32.totalorder %s11, 0
    %p141 = por %p139, %p140
    %p142 = scmp.ne.s32.totalorder %s131, %s134
    %p143 = scmp.eq.s32.totalorder %s16, 1
    %p144 = por %p142, %p143
    %p145 = scmp.ne.s32.totalorder %s134, %s135
    %p146 = scmp.eq.s32.totalorder %s16, 0
    %p147 = por %p145, %p146
    %p148 = scmp.ne.s32.totalorder %s134, %s135
    %p149 = scmp.eq.s32.totalorder %s17, 1
    %p150 = por %p148, %p149
    %p152 = scmp.ne.s32.totalorder %s135, %s151
    %p153 = scmp.eq.s32.totalorder %s17, 0
    %p154 = por %p152, %p153
    %p155 = scmp.le.s32.totalorder 1, %s11
    %p156 = scmp.lt.s32.totalorder %s11, 3
    %p157 = pnand %p155, %p156
    %p158 = pneg %p157
    // Predicated region
    $region9: #{image_downsampler.2} parent=5 // pred_check
      _
    $region10: #{image_downsampler.2} parent=5 // pred_check_branch
      %160 = sbr.rel (%p157) target = $region12
    $region11: #{image_downsampler.2} parent=5 // pred_region
      %s161 = ssub.s32 %s11, 1
      // Predicated region
      $region13: #{image_downsampler.2} parent=11 // pred_check
        %p162 = pneg %p58
      $region14: #{image_downsampler.2} parent=11 // pred_check_branch
        %164 = sbr.rel (%p162) target = $region16
      $region15: #{image_downsampler.2} parent=11 // pred_region
        _
      $region16: #{image_downsampler.2} parent=11 // pred_fallthru
        _
      // Predicated region
      $region17: #{image_downsampler.2} parent=11 // pred_check
        %p165 = pneg %p79
      $region18: #{image_downsampler.2} parent=11 // pred_check_branch
        %167 = sbr.rel (%p165) target = $region20
      $region19: #{image_downsampler.2} parent=11 // pred_region
        _
      $region20: #{image_downsampler.2} parent=11 // pred_fallthru
        _
      // Predicated region
      $region21: #{image_downsampler.2} parent=11 // pred_check
        %p168 = pneg %p100
      $region22: #{image_downsampler.2} parent=11 // pred_check_branch
        %170 = sbr.rel (%p168) target = $region24
      $region23: #{image_downsampler.2} parent=11 // pred_region
        _
      $region24: #{image_downsampler.2} parent=11 // pred_fallthru
        _
      // Predicated region
      $region25: #{image_downsampler.2} parent=11 // pred_check
        %p171 = pneg %p121
      $region26: #{image_downsampler.2} parent=11 // pred_check_branch
        %173 = sbr.rel (%p171) target = $region28
      $region27: #{image_downsampler.2} parent=11 // pred_region
        _
      $region28: #{image_downsampler.2} parent=11 // pred_fallthru
        _
    $region12: #{image_downsampler.2} parent=5 // pred_fallthru
      _
    %p174 = scmp.lt.s32.totalorder %s11, 2
    // Predicated region
    $region29: #{image_downsampler.2} parent=5 // pred_check
      %p175 = pneg %p174
    $region30: #{image_downsampler.2} parent=5 // pred_check_branch
      %177 = sbr.rel (%p175) target = $region32
    $region31: #{image_downsampler.2} parent=5 // pred_region
      // Predicated region
      $region33: #{image_downsampler.2} parent=31 // pred_check
        %p178 = pneg %p31
      $region34: #{image_downsampler.2} parent=31 // pred_check_branch
        %180 = sbr.rel (%p178) target = $region36
      $region35: #{image_downsampler.2} parent=31 // pred_region
        %p181 = scmp.lt.s32.totalorder %s11, 1
        %s182 = scalar_select %p181, %s11, 1
        %s183 = smul.addr %s182, 18
        %s184 = smul.addr %s183, 4
        %s185 = scalar_lea.vmem %s0, %s184
      $region36: #{image_downsampler.2} parent=31 // pred_fallthru
        _
    $region32: #{image_downsampler.2} parent=5 // pred_fallthru
      _
    %p186 = scmp.le.s32.totalorder 1, %s11
    %p187 = scmp.lt.s32.totalorder %s11, 3
    %p188 = pnand %p186, %p187
    %p189 = pneg %p188
    // Predicated region
    $region37: #{image_downsampler.2} parent=5 // pred_check
      _
    $region38: #{image_downsampler.2} parent=5 // pred_check_branch
      %191 = sbr.rel (%p188) target = $region40
    $region39: #{image_downsampler.2} parent=5 // pred_region
      %s192 = ssub.s32 %s11, 1
      %p193 = scmp.lt.s32.totalorder %s16, 1
      %s194 = scalar_select %p193, %s16, 1
      %s195 = smul.addr %s194, 18
      %s196 = smul.addr %s195, 4
      %s197 = scalar_lea.vmem %s0, %s196
      %p198 = pneg %p37
      %p199 = pneg %p34
      %p200 = pneg %p58
      %p201 = pneg %p55
      %p202 = pneg %p79
      %p203 = pneg %p76
      %p204 = pneg %p100
      %p205 = pneg %p97
      %p206 = pneg %p121
      %p207 = pneg %p118
      %p208 = pneg %p147
      %p209 = pneg %p144
      %p210 = scmp.lt.s32.totalorder %s16, 1
      %s211 = scalar_select %p210, %s16, 1
      %s212 = smul.addr %s211, 4
      %s213 = smul.addr %s212, 8
      %s214 = scalar_lea.vmem %s5, %s213
      %p215 = scmp.lt.s32.totalorder %s16, 1
      %s216 = scalar_select %p215, %s16, 1
      %s217 = smul.addr %s216, 18
      %s218 = smul.addr %s217, 4
      %s219 = scalar_lea.vmem %s0, %s218
      %p220 = scmp.lt.s32.totalorder %s16, 1
      %s221 = scalar_select %p220, %s16, 1
      %s222 = smul.addr %s221, 4
      %s223 = smul.addr %s222, 8
      %s224 = scalar_lea.vmem %s5, %s223
      %v226 = vld [vmem:[%s1] sm:$0xf]
      %v227 = vld [vmem:[%s1 + $0x4] sm:$0xf]
      %v228 = vld [vmem:[%s219] sm:$0xff]
      %v229 = vld [vmem:[%s219 + $0x8] sm:$0xff]
      %v230 = vld [vmem:[%s219 + $0x10] sm:$0xff]
      %v231 = vld [vmem:[%s219 + $0x18] sm:$0xff]
      %v232 = vld [vmem:[%s219 + $0x20] sm:$0xff]
      %v233 = vld [vmem:[%s219 + $0x28] sm:$0xff]
      %v234 = vld [vmem:[%s219 + $0x30] sm:$0xff]
      %v235 = vld [vmem:[%s219 + $0x38] sm:$0xff]
      %v236 = vld [vmem:[%s219 + $0x40] sm:$0xff]
      %v237 = vld [vmem:[%s2] sm:$0xff]
      %v238 = vld [vmem:[%s2 + $0x8] sm:$0xff]
      %240 = vset.pattern.permute.xlu0 0
      %241 = vperm.xlu0 %240, %v237
      %v242 = vpop.permute.xlu0 %241
      %245 = vset.pattern.permute.xlu0 0
      %246 = vperm.xlu0 %245, %v238
      %v247 = vpop.permute.xlu0 %246
      %v251 = vunpack.c.l.b16 %v226
      %v252 = vunpack.c.l.b16 %v227
      %v253 = vpack.c.b16 %v252, %v251
      %v263 = vunpack.c.l.b16 %v228
      %v264 = vunpack.c.h.b16 %v228
      %v265 = vunpack.c.l.b16 %v229
      %v266 = vunpack.c.h.b16 %v229
      %v267 = vunpack.c.l.b16 %v230
      %v268 = vunpack.c.h.b16 %v230
      %v269 = vunpack.c.l.b16 %v231
      %v270 = vunpack.c.h.b16 %v231
      %v271 = vunpack.c.l.b16 %v232
      %v272 = vunpack.c.h.b16 %v232
      %v273 = vunpack.c.l.b16 %v233
      %v274 = vunpack.c.h.b16 %v233
      %v275 = vunpack.c.l.b16 %v234
      %v276 = vunpack.c.h.b16 %v234
      %v277 = vunpack.c.l.b16 %v235
      %v278 = vunpack.c.h.b16 %v235
      %v279 = vunpack.c.l.b16 %v236
      %v280 = vunpack.c.h.b16 %v236
      %v281 = vpack.c.b16 %v265, %v263
      %v282 = vpack.c.b16 %v266, %v264
      %v283 = vpack.c.b16 %v269, %v267
      %v284 = vpack.c.b16 %v270, %v268
      %v285 = vpack.c.b16 %v273, %v271
      %v286 = vpack.c.b16 %v274, %v272
      %v287 = vpack.c.b16 %v277, %v275
      %v288 = vpack.c.b16 %v278, %v276
      %v289 = vpack.c.b16 %v279, %v279
      %v290 = vpack.c.b16 %v280, %v280
      %vm299 = vcmask 588800
      %v301 = vsel %vm299, %v253, 0
      %vm303 = vcmask 1043456
      %v305 = vsel %vm303, %v289, 0
      %v308 = vsel %vm303, %v290, 0
      %310 = vmatpush.bf16.msra.mxu0 0
      %311 = vmatpush.bf16.msra.mxu0 0
      %312 = vmatpush.bf16.msra.mxu0 0
      %313 = vmatpush.bf16.msra.mxu0 %v305
      %314 = vmatpush.bf16.msra.mxu0 %v287
      %315 = vmatpush.bf16.msra.mxu0 %v285
      %316 = vmatpush.bf16.msra.mxu0 %v283
      %317 = vmatpush.bf16.msra.mxu0 %v281
      %318 = vmatmul.bf16.gmra.mxu0 %v301
      %v319 = vpop.f32.mrf.mxu0
      %v320 = vadd.f32 %v242, %v319
      %v321 = vpop.f32.mrf.mxu0
      %v322 = vadd.f32 %v247, %v321
      %323 = vdwg.mxu0
      %324 = vmatpush.bf16.msra.mxu0 0
      %325 = vmatpush.bf16.msra.mxu0 0
      %326 = vmatpush.bf16.msra.mxu0 0
      %327 = vmatpush.bf16.msra.mxu0 %v308
      %328 = vmatpush.bf16.msra.mxu0 %v288
      %329 = vmatpush.bf16.msra.mxu0 %v286
      %330 = vmatpush.bf16.msra.mxu0 %v284
      %331 = vmatpush.bf16.msra.mxu0 %v282
      %332 = vmatmul.bf16.gmra.mxu0 %v301
      %v333 = vpop.f32.mrf.mxu0
      %v334 = vadd.f32 %v242, %v333
      %v335 = vpop.f32.mrf.mxu0
      %v336 = vadd.f32 %v247, %v335
      %337 = vdwg.mxu0
      %v342 = vrot.slane %v334, 6
      %v343 = vrot.slane %v336, 6
      %vm344 = vcmask 1041408
      %v345 = vsel %vm344, %v320, %v342
      %vm346 = vcmask 1043458
      %v347 = vsel %vm346, %v320, %v342
      %v348 = vrot.slane %v347, 2
      %vm349 = vcmask 1045508
      %v350 = vsel %vm349, %v320, %v342
      %v351 = vrot.slane %v350, 4
      %vm352 = vcmask 1045504
      %v353 = vsel %vm352, %v342, %v320
      %v354 = vrot.slane %v353, 6
      %v355 = vsel %vm344, %v322, %v343
      %v356 = vsel %vm346, %v322, %v343
      %v357 = vrot.slane %v356, 2
      %v358 = vsel %vm349, %v322, %v343
      %v359 = vrot.slane %v358, 4
      %v360 = vsel %vm352, %v343, %v322
      %v361 = vrot.slane %v360, 6
      %370 = vst [vmem:[#allocation1] ss:$4 sm:$0xff] %v345
      %v371 = vld.sshfl [vmem:[#allocation1] sm:$0xff pattern:$0x73625140]
      %v372 = vld.sshfl [vmem:[#allocation1 + $0x8] sm:$0xff pattern:$0x73625140]
      %s373 = scalar_lea.vmem [#allocation1], 32
      %374 = vst [vmem:[%s373] ss:$4 sm:$0xff] %v348
      %v375 = vld.sshfl [vmem:[#allocation1 + $0x20] sm:$0xff pattern:$0x73625140]
      %v376 = vld.sshfl [vmem:[#allocation1 + $0x28] sm:$0xff pattern:$0x73625140]
      %377 = vst [vmem:[#allocation1] ss:$4 sm:$0xff] %v351
      %v378 = vld.sshfl [vmem:[#allocation1] sm:$0xff pattern:$0x73625140]
      %v379 = vld.sshfl [vmem:[#allocation1 + $0x8] sm:$0xff pattern:$0x73625140]
      %380 = vst [vmem:[%s373] ss:$4 sm:$0xff] %v354
      %v381 = vld.sshfl [vmem:[#allocation1 + $0x20] sm:$0xff pattern:$0x73625140]
      %v382 = vld.sshfl [vmem:[#allocation1 + $0x28] sm:$0xff pattern:$0x73625140]
      %383 = vst [vmem:[#allocation1] ss:$4 sm:$0xff] %v355
      %v384 = vld.sshfl [vmem:[#allocation1] sm:$0xff pattern:$0x73625140]
      %v385 = vld.sshfl [vmem:[#allocation1 + $0x8] sm:$0xff pattern:$0x73625140]
      %386 = vst [vmem:[%s373] ss:$4 sm:$0xff] %v357
      %v387 = vld.sshfl [vmem:[#allocation1 + $0x20] sm:$0xff pattern:$0x73625140]
      %v388 = vld.sshfl [vmem:[#allocation1 + $0x28] sm:$0xff pattern:$0x73625140]
      %389 = vst [vmem:[#allocation1] ss:$4 sm:$0xff] %v359
      %v390 = vld.sshfl [vmem:[#allocation1] sm:$0xff pattern:$0x73625140]
      %v391 = vld.sshfl [vmem:[#allocation1 + $0x8] sm:$0xff pattern:$0x73625140]
      %392 = vst [vmem:[%s373] ss:$4 sm:$0xff] %v361
      %v393 = vld.sshfl [vmem:[#allocation1 + $0x20] sm:$0xff pattern:$0x73625140]
      %v394 = vld.sshfl [vmem:[#allocation1 + $0x28] sm:$0xff pattern:$0x73625140]
      %v411 = vsel %vm344, %v371, 0.0
      %v412 = vsel %vm344, %v372, 0.0
      %v413 = vadd.f32 %v411, %v412
      %414 = vadd.xlane.f32.xlu0 %v413
      %v415 = vpop.xlane.xlu0 %414
      %v416 = vsel %vm344, %v375, 0.0
      %v417 = vsel %vm344, %v376, 0.0
      %v418 = vadd.f32 %v416, %v417
      %419 = vadd.xlane.f32.xlu0 %v418
      %v420 = vpop.xlane.xlu0 %419
      %v421 = vsel %vm344, %v378, 0.0
      %v422 = vsel %vm344, %v379, 0.0
      %v423 = vadd.f32 %v421, %v422
      %424 = vadd.xlane.f32.xlu0 %v423
      %v425 = vpop.xlane.xlu0 %424
      %v426 = vsel %vm344, %v381, 0.0
      %v427 = vsel %vm344, %v382, 0.0
      %v428 = vadd.f32 %v426, %v427
      %429 = vadd.xlane.f32.xlu0 %v428
      %v430 = vpop.xlane.xlu0 %429
      %v431 = vsel %vm344, %v384, 0.0
      %v432 = vsel %vm344, %v385, 0.0
      %v433 = vadd.f32 %v431, %v432
      %434 = vadd.xlane.f32.xlu0 %v433
      %v435 = vpop.xlane.xlu0 %434
      %v436 = vsel %vm344, %v387, 0.0
      %v437 = vsel %vm344, %v388, 0.0
      %v438 = vadd.f32 %v436, %v437
      %439 = vadd.xlane.f32.xlu0 %v438
      %v440 = vpop.xlane.xlu0 %439
      %v441 = vsel %vm344, %v390, 0.0
      %v442 = vsel %vm344, %v391, 0.0
      %v443 = vadd.f32 %v441, %v442
      %444 = vadd.xlane.f32.xlu0 %v443
      %v445 = vpop.xlane.xlu0 %444
      %v446 = vsel %vm344, %v393, 0.0
      %v447 = vsel %vm344, %v394, 0.0
      %v448 = vadd.f32 %v446, %v447
      %449 = vadd.xlane.f32.xlu0 %v448
      %v450 = vpop.xlane.xlu0 %449
      %v451 = vsel %vm344, %v415, 0.0
      %v452 = vrot.slane %v451, 4
      %v453 = vadd.f32 %v451, %v452
      %v454 = vrot.slane %v453, 2
      %v455 = vadd.f32 %v453, %v454
      %v456 = vrot.slane %v455, 1
      %v457 = vadd.f32 %v455, %v456
      %v458 = vsel %vm344, %v420, 0.0
      %v459 = vrot.slane %v458, 4
      %v460 = vadd.f32 %v458, %v459
      %v461 = vrot.slane %v460, 2
      %v462 = vadd.f32 %v460, %v461
      %v463 = vrot.slane %v462, 1
      %v464 = vadd.f32 %v462, %v463
      %v465 = vsel %vm344, %v425, 0.0
      %v466 = vrot.slane %v465, 4
      %v467 = vadd.f32 %v465, %v466
      %v468 = vrot.slane %v467, 2
      %v469 = vadd.f32 %v467, %v468
      %v470 = vrot.slane %v469, 1
      %v471 = vadd.f32 %v469, %v470
      %v472 = vsel %vm344, %v430, 0.0
      %v473 = vrot.slane %v472, 4
      %v474 = vadd.f32 %v472, %v473
      %v475 = vrot.slane %v474, 2
      %v476 = vadd.f32 %v474, %v475
      %v477 = vrot.slane %v476, 1
      %v478 = vadd.f32 %v476, %v477
      %v479 = vsel %vm344, %v435, 0.0
      %v480 = vrot.slane %v479, 4
      %v481 = vadd.f32 %v479, %v480
      %v482 = vrot.slane %v481, 2
      %v483 = vadd.f32 %v481, %v482
      %v484 = vrot.slane %v483, 1
      %v485 = vadd.f32 %v483, %v484
      %v486 = vsel %vm344, %v440, 0.0
      %v487 = vrot.slane %v486, 4
      %v488 = vadd.f32 %v486, %v487
      %v489 = vrot.slane %v488, 2
      %v490 = vadd.f32 %v488, %v489
      %v491 = vrot.slane %v490, 1
      %v492 = vadd.f32 %v490, %v491
      %v493 = vsel %vm344, %v445, 0.0
      %v494 = vrot.slane %v493, 4
      %v495 = vadd.f32 %v493, %v494
      %v496 = vrot.slane %v495, 2
      %v497 = vadd.f32 %v495, %v496
      %v498 = vrot.slane %v497, 1
      %v499 = vadd.f32 %v497, %v498
      %v500 = vsel %vm344, %v450, 0.0
      %v501 = vrot.slane %v500, 4
      %v502 = vadd.f32 %v500, %v501
      %v503 = vrot.slane %v502, 2
      %v504 = vadd.f32 %v502, %v503
      %v505 = vrot.slane %v504, 1
      %v506 = vadd.f32 %v504, %v505
      %v507 = vmul.f32 %v457, 0.001953125
      %v508 = vmul.f32 %v464, 0.001953125
      %v509 = vmul.f32 %v471, 0.001953125
      %v510 = vmul.f32 %v478, 0.001953125
      %v511 = vmul.f32 %v485, 0.001953125
      %v512 = vmul.f32 %v492, 0.001953125
      %v513 = vmul.f32 %v499, 0.001953125
      %v514 = vmul.f32 %v506, 0.001953125
      %v515 = vsub.f32 %v345, %v507
      %v516 = vsub.f32 %v348, %v508
      %v517 = vsub.f32 %v351, %v509
      %v518 = vsub.f32 %v354, %v510
      %v519 = vsub.f32 %v355, %v511
      %v520 = vsub.f32 %v357, %v512
      %v521 = vsub.f32 %v359, %v513
      %v522 = vsub.f32 %v361, %v514
      %v523 = vmul.f32 %v515, %v515
      %v524 = vmul.f32 %v516, %v516
      %v525 = vmul.f32 %v517, %v517
      %v526 = vmul.f32 %v518, %v518
      %v527 = vmul.f32 %v519, %v519
      %v528 = vmul.f32 %v520, %v520
      %v529 = vmul.f32 %v521, %v521
      %v530 = vmul.f32 %v522, %v522
      %539 = vst [vmem:[#allocation1] ss:$4 sm:$0xff] %v523
      %v540 = vld.sshfl [vmem:[#allocation1] sm:$0xff pattern:$0x73625140]
      %v541 = vld.sshfl [vmem:[#allocation1 + $0x8] sm:$0xff pattern:$0x73625140]
      %s542 = scalar_lea.vmem [#allocation1], 32
      %543 = vst [vmem:[%s542] ss:$4 sm:$0xff] %v524
      %v544 = vld.sshfl [vmem:[#allocation1 + $0x20] sm:$0xff pattern:$0x73625140]
      %v545 = vld.sshfl [vmem:[#allocation1 + $0x28] sm:$0xff pattern:$0x73625140]
      %546 = vst [vmem:[#allocation1] ss:$4 sm:$0xff] %v525
      %v547 = vld.sshfl [vmem:[#allocation1] sm:$0xff pattern:$0x73625140]
      %v548 = vld.sshfl [vmem:[#allocation1 + $0x8] sm:$0xff pattern:$0x73625140]
      %549 = vst [vmem:[%s542] ss:$4 sm:$0xff] %v526
      %v550 = vld.sshfl [vmem:[#allocation1 + $0x20] sm:$0xff pattern:$0x73625140]
      %v551 = vld.sshfl [vmem:[#allocation1 + $0x28] sm:$0xff pattern:$0x73625140]
      %552 = vst [vmem:[#allocation1] ss:$4 sm:$0xff] %v527
      %v553 = vld.sshfl [vmem:[#allocation1] sm:$0xff pattern:$0x73625140]
      %v554 = vld.sshfl [vmem:[#allocation1 + $0x8] sm:$0xff pattern:$0x73625140]
      %555 = vst [vmem:[%s542] ss:$4 sm:$0xff] %v528
      %v556 = vld.sshfl [vmem:[#allocation1 + $0x20] sm:$0xff pattern:$0x73625140]
      %v557 = vld.sshfl [vmem:[#allocation1 + $0x28] sm:$0xff pattern:$0x73625140]
      %558 = vst [vmem:[#allocation1] ss:$4 sm:$0xff] %v529
      %v559 = vld.sshfl [vmem:[#allocation1] sm:$0xff pattern:$0x73625140]
      %v560 = vld.sshfl [vmem:[#allocation1 + $0x8] sm:$0xff pattern:$0x73625140]
      %561 = vst [vmem:[%s542] ss:$4 sm:$0xff] %v530
      %v562 = vld.sshfl [vmem:[#allocation1 + $0x20] sm:$0xff pattern:$0x73625140]
      %v563 = vld.sshfl [vmem:[#allocation1 + $0x28] sm:$0xff pattern:$0x73625140]
      %v580 = vsel %vm344, %v540, 0.0
      %v581 = vsel %vm344, %v541, 0.0
      %v582 = vadd.f32 %v580, %v581
      %583 = vadd.xlane.f32.xlu0 %v582
      %v584 = vpop.xlane.xlu0 %583
      %v585 = vsel %vm344, %v544, 0.0
      %v586 = vsel %vm344, %v545, 0.0
      %v587 = vadd.f32 %v585, %v586
      %588 = vadd.xlane.f32.xlu0 %v587
      %v589 = vpop.xlane.xlu0 %588
      %v590 = vsel %vm344, %v547, 0.0
      %v591 = vsel %vm344, %v548, 0.0
      %v592 = vadd.f32 %v590, %v591
      %593 = vadd.xlane.f32.xlu0 %v592
      %v594 = vpop.xlane.xlu0 %593
      %v595 = vsel %vm344, %v550, 0.0
      %v596 = vsel %vm344, %v551, 0.0
      %v597 = vadd.f32 %v595, %v596
      %598 = vadd.xlane.f32.xlu0 %v597
      %v599 = vpop.xlane.xlu0 %598
      %v600 = vsel %vm344, %v553, 0.0
      %v601 = vsel %vm344, %v554, 0.0
      %v602 = vadd.f32 %v600, %v601
      %603 = vadd.xlane.f32.xlu0 %v602
      %v604 = vpop.xlane.xlu0 %603
      %v605 = vsel %vm344, %v556, 0.0
      %v606 = vsel %vm344, %v557, 0.0
      %v607 = vadd.f32 %v605, %v606
      %608 = vadd.xlane.f32.xlu0 %v607
      %v609 = vpop.xlane.xlu0 %608
      %v610 = vsel %vm344, %v559, 0.0
      %v611 = vsel %vm344, %v560, 0.0
      %v612 = vadd.f32 %v610, %v611
      %613 = vadd.xlane.f32.xlu0 %v612
      %v614 = vpop.xlane.xlu0 %613
      %v615 = vsel %vm344, %v562, 0.0
      %v616 = vsel %vm344, %v563, 0.0
      %v617 = vadd.f32 %v615, %v616
      %618 = vadd.xlane.f32.xlu0 %v617
      %v619 = vpop.xlane.xlu0 %618
      %v620 = vsel %vm344, %v584, 0.0
      %v621 = vrot.slane %v620, 4
      %v622 = vadd.f32 %v620, %v621
      %v623 = vrot.slane %v622, 2
      %v624 = vadd.f32 %v622, %v623
      %v625 = vrot.slane %v624, 1
      %v626 = vadd.f32 %v624, %v625
      %v627 = vsel %vm344, %v589, 0.0
      %v628 = vrot.slane %v627, 4
      %v629 = vadd.f32 %v627, %v628
      %v630 = vrot.slane %v629, 2
      %v631 = vadd.f32 %v629, %v630
      %v632 = vrot.slane %v631, 1
      %v633 = vadd.f32 %v631, %v632
      %v634 = vsel %vm344, %v594, 0.0
      %v635 = vrot.slane %v634, 4
      %v636 = vadd.f32 %v634, %v635
      %v637 = vrot.slane %v636, 2
      %v638 = vadd.f32 %v636, %v637
      %v639 = vrot.slane %v638, 1
      %v640 = vadd.f32 %v638, %v639
      %v641 = vsel %vm344, %v599, 0.0
      %v642 = vrot.slane %v641, 4
      %v643 = vadd.f32 %v641, %v642
      %v644 = vrot.slane %v643, 2
      %v645 = vadd.f32 %v643, %v644
      %v646 = vrot.slane %v645, 1
      %v647 = vadd.f32 %v645, %v646
      %v648 = vsel %vm344, %v604, 0.0
      %v649 = vrot.slane %v648, 4
      %v650 = vadd.f32 %v648, %v649
      %v651 = vrot.slane %v650, 2
      %v652 = vadd.f32 %v650, %v651
      %v653 = vrot.slane %v652, 1
      %v654 = vadd.f32 %v652, %v653
      %v655 = vsel %vm344, %v609, 0.0
      %v656 = vrot.slane %v655, 4
      %v657 = vadd.f32 %v655, %v656
      %v658 = vrot.slane %v657, 2
      %v659 = vadd.f32 %v657, %v658
      %v660 = vrot.slane %v659, 1
      %v661 = vadd.f32 %v659, %v660
      %v662 = vsel %vm344, %v614, 0.0
      %v663 = vrot.slane %v662, 4
      %v664 = vadd.f32 %v662, %v663
      %v665 = vrot.slane %v664, 2
      %v666 = vadd.f32 %v664, %v665
      %v667 = vrot.slane %v666, 1
      %v668 = vadd.f32 %v666, %v667
      %v669 = vsel %vm344, %v619, 0.0
      %v670 = vrot.slane %v669, 4
      %v671 = vadd.f32 %v669, %v670
      %v672 = vrot.slane %v671, 2
      %v673 = vadd.f32 %v671, %v672
      %v674 = vrot.slane %v673, 1
      %v675 = vadd.f32 %v673, %v674
      %v676 = vmul.f32 %v626, 0.001953125
      %v677 = vmul.f32 %v633, 0.001953125
      %v678 = vmul.f32 %v640, 0.001953125
      %v679 = vmul.f32 %v647, 0.001953125
      %v680 = vmul.f32 %v654, 0.001953125
      %v681 = vmul.f32 %v661, 0.001953125
      %v682 = vmul.f32 %v668, 0.001953125
      %v683 = vmul.f32 %v675, 0.001953125
      %v684 = vadd.f32 %v676, 1e-05
      %v685 = vadd.f32 %v677, 1e-05
      %v686 = vadd.f32 %v678, 1e-05
      %v687 = vadd.f32 %v679, 1e-05
      %v688 = vadd.f32 %v680, 1e-05
      %v689 = vadd.f32 %v681, 1e-05
      %v690 = vadd.f32 %v682, 1e-05
      %v691 = vadd.f32 %v683, 1e-05
      %v692 = vrsqrt.pop %v684
      %v693 = vmul.f32 %v692, %v684
      %v694 = vmul.f32 %v693, %v692
      %v695 = vmul.f32 0.5, %v694
      %v696 = vsub.f32 1.5, %v695
      %v697 = vmul.f32 %v692, %v696
      %vm698 = vweird.f32 %v684
      %vm699 = vweird.f32 %v692
      %vm700 = vmor %vm698, %vm699
      %v701 = vsel %vm700, %v692, %v697
      %v702 = vrsqrt.pop %v685
      %v703 = vmul.f32 %v702, %v685
      %v704 = vmul.f32 %v703, %v702
      %v705 = vmul.f32 0.5, %v704
      %v706 = vsub.f32 1.5, %v705
      %v707 = vmul.f32 %v702, %v706
      %vm708 = vweird.f32 %v685
      %vm709 = vweird.f32 %v702
      %vm710 = vmor %vm708, %vm709
      %v711 = vsel %vm710, %v702, %v707
      %v712 = vrsqrt.pop %v686
      %v713 = vmul.f32 %v712, %v686
      %v714 = vmul.f32 %v713, %v712
      %v715 = vmul.f32 0.5, %v714
      %v716 = vsub.f32 1.5, %v715
      %v717 = vmul.f32 %v712, %v716
      %vm718 = vweird.f32 %v686
      %vm719 = vweird.f32 %v712
      %vm720 = vmor %vm718, %vm719
      %v721 = vsel %vm720, %v712, %v717
      %v722 = vrsqrt.pop %v687
      %v723 = vmul.f32 %v722, %v687
      %v724 = vmul.f32 %v723, %v722
      %v725 = vmul.f32 0.5, %v724
      %v726 = vsub.f32 1.5, %v725
      %v727 = vmul.f32 %v722, %v726
      %vm728 = vweird.f32 %v687
      %vm729 = vweird.f32 %v722
      %vm730 = vmor %vm728, %vm729
      %v731 = vsel %vm730, %v722, %v727
      %v732 = vrsqrt.pop %v688
      %v733 = vmul.f32 %v732, %v688
      %v734 = vmul.f32 %v733, %v732
      %v735 = vmul.f32 0.5, %v734
      %v736 = vsub.f32 1.5, %v735
      %v737 = vmul.f32 %v732, %v736
      %vm738 = vweird.f32 %v688
      %vm739 = vweird.f32 %v732
      %vm740 = vmor %vm738, %vm739
      %v741 = vsel %vm740, %v732, %v737
      %v742 = vrsqrt.pop %v689
      %v743 = vmul.f32 %v742, %v689
      %v744 = vmul.f32 %v743, %v742
      %v745 = vmul.f32 0.5, %v744
      %v746 = vsub.f32 1.5, %v745
      %v747 = vmul.f32 %v742, %v746
      %vm748 = vweird.f32 %v689
      %vm749 = vweird.f32 %v742
      %vm750 = vmor %vm748, %vm749
      %v751 = vsel %vm750, %v742, %v747
      %v752 = vrsqrt.pop %v690
      %v753 = vmul.f32 %v752, %v690
      %v754 = vmul.f32 %v753, %v752
      %v755 = vmul.f32 0.5, %v754
      %v756 = vsub.f32 1.5, %v755
      %v757 = vmul.f32 %v752, %v756
      %vm758 = vweird.f32 %v690
      %vm759 = vweird.f32 %v752
      %vm760 = vmor %vm758, %vm759
      %v761 = vsel %vm760, %v752, %v757
      %v762 = vrsqrt.pop %v691
      %v763 = vmul.f32 %v762, %v691
      %v764 = vmul.f32 %v763, %v762
      %v765 = vmul.f32 0.5, %v764
      %v766 = vsub.f32 1.5, %v765
      %v767 = vmul.f32 %v762, %v766
      %vm768 = vweird.f32 %v691
      %vm769 = vweird.f32 %v762
      %vm770 = vmor %vm768, %vm769
      %v771 = vsel %vm770, %v762, %v767
      %v772 = vmul.f32 %v515, %v701
      %v773 = vmul.f32 %v516, %v711
      %v774 = vmul.f32 %v517, %v721
      %v775 = vmul.f32 %v518, %v731
      %v776 = vmul.f32 %v519, %v741
      %v777 = vmul.f32 %v520, %v751
      %v778 = vmul.f32 %v521, %v761
      %v779 = vmul.f32 %v522, %v771
      %v780 = vld [vmem:[%s3] sm:$0xff]
      %v781 = vld [vmem:[%s3 + $0x8] sm:$0xff]
      %783 = vset.pattern.permute.xlu0 0
      %784 = vperm.xlu0 %783, %v780
      %v785 = vpop.permute.xlu0 %784
      %787 = vset.pattern.permute.xlu0 0
      %788 = vperm.xlu0 %787, %v781
      %v789 = vpop.permute.xlu0 %788
      %v791 = vunpack.c.l.s4 269488144
      %v792 = vunpack.c.0.s8 %v791
      %v793 = vperm.slane %v785, %v792
      %v795 = vunpack.c.l.s4 842150450
      %v796 = vunpack.c.0.s8 %v795
      %v797 = vperm.slane %v785, %v796
      %v799 = vunpack.c.l.s4 1414812756
      %v800 = vunpack.c.0.s8 %v799
      %v801 = vperm.slane %v785, %v800
      %v803 = vunpack.c.l.s4 1987475062
      %v804 = vunpack.c.0.s8 %v803
      %v805 = vperm.slane %v785, %v804
      %v807 = vunpack.c.l.s4 269488144
      %v808 = vunpack.c.0.s8 %v807
      %v809 = vperm.slane %v789, %v808
      %v811 = vunpack.c.l.s4 842150450
      %v812 = vunpack.c.0.s8 %v811
      %v813 = vperm.slane %v789, %v812
      %v815 = vunpack.c.l.s4 1414812756
      %v816 = vunpack.c.0.s8 %v815
      %v817 = vperm.slane %v789, %v816
      %v819 = vunpack.c.l.s4 1987475062
      %v820 = vunpack.c.0.s8 %v819
      %v821 = vperm.slane %v789, %v820
      %v830 = vmul.f32 %v772, %v793
      %v831 = vmul.f32 %v773, %v797
      %v832 = vmul.f32 %v774, %v801
      %v833 = vmul.f32 %v775, %v805
      %v834 = vmul.f32 %v776, %v809
      %v835 = vmul.f32 %v777, %v813
      %v836 = vmul.f32 %v778, %v817
      %v837 = vmul.f32 %v779, %v821
      %v838 = vld [vmem:[%s4] sm:$0xff]
      %v839 = vld [vmem:[%s4 + $0x8] sm:$0xff]
      %841 = vset.pattern.permute.xlu0 0
      %842 = vperm.xlu0 %841, %v838
      %v843 = vpop.permute.xlu0 %842
      %845 = vset.pattern.permute.xlu0 0
      %846 = vperm.xlu0 %845, %v839
      %v847 = vpop.permute.xlu0 %846
      %v849 = vunpack.c.l.s4 269488144
      %v850 = vunpack.c.0.s8 %v849
      %v851 = vperm.slane %v843, %v850
      %v853 = vunpack.c.l.s4 842150450
      %v854 = vunpack.c.0.s8 %v853
      %v855 = vperm.slane %v843, %v854
      %v857 = vunpack.c.l.s4 1414812756
      %v858 = vunpack.c.0.s8 %v857
      %v859 = vperm.slane %v843, %v858
      %v861 = vunpack.c.l.s4 1987475062
      %v862 = vunpack.c.0.s8 %v861
      %v863 = vperm.slane %v843, %v862
      %v865 = vunpack.c.l.s4 269488144
      %v866 = vunpack.c.0.s8 %v865
      %v867 = vperm.slane %v847, %v866
      %v869 = vunpack.c.l.s4 842150450
      %v870 = vunpack.c.0.s8 %v869
      %v871 = vperm.slane %v847, %v870
      %v873 = vunpack.c.l.s4 1414812756
      %v874 = vunpack.c.0.s8 %v873
      %v875 = vperm.slane %v847, %v874
      %v877 = vunpack.c.l.s4 1987475062
      %v878 = vunpack.c.0.s8 %v877
      %v879 = vperm.slane %v847, %v878
      %v888 = vadd.f32 %v830, %v851
      %v889 = vadd.f32 %v831, %v855
      %v890 = vadd.f32 %v832, %v859
      %v891 = vadd.f32 %v833, %v863
      %v892 = vadd.f32 %v834, %v867
      %v893 = vadd.f32 %v835, %v871
      %v894 = vadd.f32 %v836, %v875
      %v895 = vadd.f32 %v837, %v879
      %v896 = vsub.f32 0.0, %v888
      %v897 = vsub.f32 0.0, %v889
      %v898 = vsub.f32 0.0, %v890
      %v899 = vsub.f32 0.0, %v891
      %v900 = vsub.f32 0.0, %v892
      %v901 = vsub.f32 0.0, %v893
      %v902 = vsub.f32 0.0, %v894
      %v903 = vsub.f32 0.0, %v895
      %v904 = vmul.f32 %v896, 1.442695
      %v905 = vpow.pop %v904
      %v906 = vmul.f32 %v897, 1.442695
      %v907 = vpow.pop %v906
      %v908 = vmul.f32 %v898, 1.442695
      %v909 = vpow.pop %v908
      %v910 = vmul.f32 %v899, 1.442695
      %v911 = vpow.pop %v910
      %v912 = vmul.f32 %v900, 1.442695
      %v913 = vpow.pop %v912
      %v914 = vmul.f32 %v901, 1.442695
      %v915 = vpow.pop %v914
      %v916 = vmul.f32 %v902, 1.442695
      %v917 = vpow.pop %v916
      %v918 = vmul.f32 %v903, 1.442695
      %v919 = vpow.pop %v918
      %v920 = vadd.f32 %v905, 1.0
      %v921 = vadd.f32 %v907, 1.0
      %v922 = vadd.f32 %v909, 1.0
      %v923 = vadd.f32 %v911, 1.0
      %v924 = vadd.f32 %v913, 1.0
      %v925 = vadd.f32 %v915, 1.0
      %v926 = vadd.f32 %v917, 1.0
      %v927 = vadd.f32 %v919, 1.0
      %v928 = vrcp.pop %v920
      %v929 = vrcp.pop %v921
      %v930 = vrcp.pop %v922
      %v931 = vrcp.pop %v923
      %v932 = vrcp.pop %v924
      %v933 = vrcp.pop %v925
      %v934 = vrcp.pop %v926
      %v935 = vrcp.pop %v927
      %v936 = vmul.f32 %v888, %v928
      %v937 = vmul.f32 %v889, %v929
      %v938 = vmul.f32 %v890, %v930
      %v939 = vmul.f32 %v891, %v931
      %v940 = vmul.f32 %v892, %v932
      %v941 = vmul.f32 %v893, %v933
      %v942 = vmul.f32 %v894, %v934
      %v943 = vmul.f32 %v895, %v935
      %952 = vst [vmem:[#allocation1] ss:$4 sm:$0xff] %v936
      %s953 = scalar_lea.vmem [#allocation1], 1
      %954 = vst [vmem:[%s953] ss:$4 sm:$0xff] %v937
      %s955 = scalar_lea.vmem [#allocation1], 2
      %956 = vst [vmem:[%s955] ss:$4 sm:$0xff] %v938
      %s957 = scalar_lea.vmem [#allocation1], 3
      %958 = vst [vmem:[%s957] ss:$4 sm:$0xff] %v939
      %s959 = scalar_lea.vmem [#allocation1], 32
      %960 = vst [vmem:[%s959] ss:$4 sm:$0xff] %v940
      %s961 = scalar_lea.vmem [#allocation1], 33
      %962 = vst [vmem:[%s961] ss:$4 sm:$0xff] %v941
      %s963 = scalar_lea.vmem [#allocation1], 34
      %964 = vst [vmem:[%s963] ss:$4 sm:$0xff] %v942
      %s965 = scalar_lea.vmem [#allocation1], 35
      %966 = vst [vmem:[%s965] ss:$4 sm:$0xff] %v943
      %v967 = vld.sshfl [vmem:[#allocation1] sm:$0xff pattern:$0x73625140]
      %v968 = vld.sshfl [vmem:[#allocation1 + $0x8] sm:$0xff pattern:$0x73625140]
      %v969 = vld.sshfl [vmem:[#allocation1 + $0x20] sm:$0xff pattern:$0x73625140]
      %v970 = vld.sshfl [vmem:[#allocation1 + $0x28] sm:$0xff pattern:$0x73625140]
      %975 = vst [vmem:[%s224] sm:$0xff] %v967
      %976 = vst [vmem:[%s224 + $0x8] sm:$0xff] %v968
      %977 = vst [vmem:[%s224 + $0x10] sm:$0xff] %v969
      %978 = vst [vmem:[%s224 + $0x18] sm:$0xff] %v970
      %p979 = scmp.lt.s32.totalorder %s16, 1
      %s980 = scalar_select %p979, %s16, 1
      %s981 = smul.addr %s980, 4
      %s982 = smul.addr %s981, 8
      %s983 = scalar_lea.vmem %s5, %s982
      // Predicated region
      $region41: #{image_downsampler.2} parent=39 // pred_check
        %p984 = pneg %p144
      $region42: #{image_downsampler.2} parent=39 // pred_check_branch
        %986 = sbr.rel (%p984) target = $region44
      $region43: #{image_downsampler.2} parent=39 // pred_region
        _
      $region44: #{image_downsampler.2} parent=39 // pred_fallthru
        _
    $region40: #{image_downsampler.2} parent=5 // pred_fallthru
      _
    %p987 = scmp.le.s32.totalorder 2, %s11
    // Predicated region
    $region45: #{image_downsampler.2} parent=5 // pred_check
      %p988 = pneg %p987
    $region46: #{image_downsampler.2} parent=5 // pred_check_branch
      %990 = sbr.rel (%p988) target = $region48
    $region47: #{image_downsampler.2} parent=5 // pred_region
      %s991 = ssub.s32 %s11, 2
      // Predicated region
      $region49: #{image_downsampler.2} parent=47 // pred_check
        %p992 = pneg %p150
      $region50: #{image_downsampler.2} parent=47 // pred_check_branch
        %994 = sbr.rel (%p992) target = $region52
      $region51: #{image_downsampler.2} parent=47 // pred_region
        %p995 = scmp.lt.s32.totalorder %s17, 1
        %s996 = scalar_select %p995, %s17, 1
        %s997 = smul.addr %s996, 4
        %s998 = smul.addr %s997, 8
        %s999 = scalar_lea.vmem %s5, %s998
      $region52: #{image_downsampler.2} parent=47 // pred_fallthru
        _
    $region48: #{image_downsampler.2} parent=5 // pred_fallthru
      _
  $region6: #{image_downsampler.2} parent=0 // loop_footer
    %s15 = sadd.s32 1, %s11
  $region7: #{image_downsampler.2} parent=0 // loop_footer_branch
    %10 = sbr.rel target = $region3
  $region8: #{image_downsampler.2} parent=0 // loop_exit
    _

// kernel: image_downsampler.3
$region0: #{image_downsampler.3}
  #allocation0 [shape = 'u32[]', space=smem, size = 0x4, offset = 0x4, fixed_abs, tag = 'smem constant byte address 0x4 - core index']
  #allocation1 [shape = 'u32[72,128]{1,0:T(1,128)}', space=vmem, size = 0x9000, scoped, tag = 'internal scratch']
  %s0 = inlined_call_operand.vmem [shape: bf16[2,144,64], index: 0, kind: input, shape index: {}]
  %s1 = inlined_call_operand.vmem [shape: bf16[32,144], index: 1, kind: input, shape index: {}]
  %s2 = inlined_call_operand.vmem [shape: f32[32,1], index: 2, kind: input, shape index: {}]
  %s3 = inlined_call_operand.vmem [shape: f32[32,1], index: 3, kind: input, shape index: {}]
  %s4 = inlined_call_operand.vmem [shape: f32[32,1], index: 4, kind: input, shape index: {}]
  %s5 = inlined_call_operand.vmem [shape: f32[2,32,64], index: 5, kind: output, shape index: {}]
  %s6 = sld [smem:[#allocation0]]
  $region53: #{image_downsampler.3} parent=0
    _
  %s8 = ssub.s32 1, %s6
  %s9 = scalar_select 0, %s8, %s6
  loop: start=0, step=1, limit=4
  $region2: #{image_downsampler.3} parent=0 // loop_pre_header
    _
  $region3: #{image_downsampler.3} parent=0 // loop_header
    %s11 = sphi 0, %s15
    %p12 = scmp.ge.s32.totalorder %s11, 4
    %s21 = sphi 0, %s23
    %s24 = sphi 0, %s21
    %s25 = sphi 0, %s24
    %s41 = sphi 0, %s25
    %s45 = sphi 0, %s45
    %s47 = sphi 0, %s45
    %s48 = sphi 0, %s47
    %s62 = sphi 0, %s48
    %s66 = sphi 0, %s66
    %s68 = sphi 0, %s66
    %s69 = sphi 0, %s68
    %s83 = sphi 0, %s69
    %s87 = sphi 0, %s87
    %s89 = sphi 0, %s87
    %s90 = sphi 0, %s89
    %s104 = sphi 0, %s90
    %s108 = sphi 0, %s108
    %s110 = sphi 0, %s108
    %s111 = sphi 0, %s110
    %s125 = sphi 0, %s111
    %s131 = sphi 0, %s133
    %s134 = sphi 0, %s131
    %s135 = sphi 0, %s134
    %s151 = sphi 0, %s135
  $region4: #{image_downsampler.3} parent=0 // loop_header_branch
    %14 = sbr.rel (%p12) target = $region8
  $region5: #{image_downsampler.3} parent=0 // loop_body
    %s16 = ssub.s32 %s11, 1
    %s17 = ssub.s32 %s11, 2
    %s18 = sadd.s32 %s11, 1
    %s19 = ssub.s32 %s11, %s18
    %p20 = scmp.eq.s32.totalorder %s19, 0
    %s22 = sadd.s32 %s21, 1
    %s23 = scalar_select %p20, %s21, %s22
    %p26 = pneg %p20
    %p27 = scmp.eq.s32.totalorder %s11, 1
    %p28 = por %p26, %p27
    %p29 = scmp.ne.s32.totalorder %s21, %s24
    %p30 = scmp.eq.s32.totalorder %s11, 0
    %p31 = por %p29, %p30
    %p32 = scmp.ne.s32.totalorder %s21, %s24
    %p33 = scmp.eq.s32.totalorder %s16, 1
    %p34 = por %p32, %p33
    %p35 = scmp.ne.s32.totalorder %s24, %s25
    %p36 = scmp.eq.s32.totalorder %s16, 0
    %p37 = por %p35, %p36
    %p38 = scmp.ne.s32.totalorder %s24, %s25
    %p39 = scmp.eq.s32.totalorder %s17, 1
    %p40 = por %p38, %p39
    %p42 = scmp.ne.s32.totalorder %s25, %s41
    %p43 = scmp.eq.s32.totalorder %s17, 0
    %p44 = por %p42, %p43
    %s46 = sadd.s32 %s45, 1
    %p49 = scmp.eq.s32.totalorder %s11, 1
    %p50 = scmp.ne.s32.totalorder %s45, %s47
    %p51 = scmp.eq.s32.totalorder %s11, 0
    %p52 = por %p50, %p51
    %p53 = scmp.ne.s32.totalorder %s45, %s47
    %p54 = scmp.eq.s32.totalorder %s16, 1
    %p55 = por %p53, %p54
    %p56 = scmp.ne.s32.totalorder %s47, %s48
    %p57 = scmp.eq.s32.totalorder %s16, 0
    %p58 = por %p56, %p57
    %p59 = scmp.ne.s32.totalorder %s47, %s48
    %p60 = scmp.eq.s32.totalorder %s17, 1
    %p61 = por %p59, %p60
    %p63 = scmp.ne.s32.totalorder %s48, %s62
    %p64 = scmp.eq.s32.totalorder %s17, 0
    %p65 = por %p63, %p64
    %s67 = sadd.s32 %s66, 1
    %p70 = scmp.eq.s32.totalorder %s11, 1
    %p71 = scmp.ne.s32.totalorder %s66, %s68
    %p72 = scmp.eq.s32.totalorder %s11, 0
    %p73 = por %p71, %p72
    %p74 = scmp.ne.s32.totalorder %s66, %s68
    %p75 = scmp.eq.s32.totalorder %s16, 1
    %p76 = por %p74, %p75
    %p77 = scmp.ne.s32.totalorder %s68, %s69
    %p78 = scmp.eq.s32.totalorder %s16, 0
    %p79 = por %p77, %p78
    %p80 = scmp.ne.s32.totalorder %s68, %s69
    %p81 = scmp.eq.s32.totalorder %s17, 1
    %p82 = por %p80, %p81
    %p84 = scmp.ne.s32.totalorder %s69, %s83
    %p85 = scmp.eq.s32.totalorder %s17, 0
    %p86 = por %p84, %p85
    %s88 = sadd.s32 %s87, 1
    %p91 = scmp.eq.s32.totalorder %s11, 1
    %p92 = scmp.ne.s32.totalorder %s87, %s89
    %p93 = scmp.eq.s32.totalorder %s11, 0
    %p94 = por %p92, %p93
    %p95 = scmp.ne.s32.totalorder %s87, %s89
    %p96 = scmp.eq.s32.totalorder %s16, 1
    %p97 = por %p95, %p96
    %p98 = scmp.ne.s32.totalorder %s89, %s90
    %p99 = scmp.eq.s32.totalorder %s16, 0
    %p100 = por %p98, %p99
    %p101 = scmp.ne.s32.totalorder %s89, %s90
    %p102 = scmp.eq.s32.totalorder %s17, 1
    %p103 = por %p101, %p102
    %p105 = scmp.ne.s32.totalorder %s90, %s104
    %p106 = scmp.eq.s32.totalorder %s17, 0
    %p107 = por %p105, %p106
    %s109 = sadd.s32 %s108, 1
    %p112 = scmp.eq.s32.totalorder %s11, 1
    %p113 = scmp.ne.s32.totalorder %s108, %s110
    %p114 = scmp.eq.s32.totalorder %s11, 0
    %p115 = por %p113, %p114
    %p116 = scmp.ne.s32.totalorder %s108, %s110
    %p117 = scmp.eq.s32.totalorder %s16, 1
    %p118 = por %p116, %p117
    %p119 = scmp.ne.s32.totalorder %s110, %s111
    %p120 = scmp.eq.s32.totalorder %s16, 0
    %p121 = por %p119, %p120
    %p122 = scmp.ne.s32.totalorder %s110, %s111
    %p123 = scmp.eq.s32.totalorder %s17, 1
    %p124 = por %p122, %p123
    %p126 = scmp.ne.s32.totalorder %s111, %s125
    %p127 = scmp.eq.s32.totalorder %s17, 0
    %p128 = por %p126, %p127
    %s129 = ssub.s32 %s11, %s18
    %p130 = scmp.eq.s32.totalorder %s129, 0
    %s132 = sadd.s32 %s131, 1
    %s133 = scalar_select %p130, %s131, %s132
    %p136 = pneg %p130
    %p137 = scmp.eq.s32.totalorder %s11, 1
    %p138 = por %p136, %p137
    %p139 = scmp.ne.s32.totalorder %s131, %s134
    %p140 = scmp.eq.s32.totalorder %s11, 0
    %p141 = por %p139, %p140
    %p142 = scmp.ne.s32.totalorder %s131, %s134
    %p143 = scmp.eq.s32.totalorder %s16, 1
    %p144 = por %p142, %p143
    %p145 = scmp.ne.s32.totalorder %s134, %s135
    %p146 = scmp.eq.s32.totalorder %s16, 0
    %p147 = por %p145, %p146
    %p148 = scmp.ne.s32.totalorder %s134, %s135
    %p149 = scmp.eq.s32.totalorder %s17, 1
    %p150 = por %p148, %p149
    %p152 = scmp.ne.s32.totalorder %s135, %s151
    %p153 = scmp.eq.s32.totalorder %s17, 0
    %p154 = por %p152, %p153
    %p155 = scmp.le.s32.totalorder 1, %s11
    %p156 = scmp.lt.s32.totalorder %s11, 3
    %p157 = pnand %p155, %p156
    %p158 = pneg %p157
    // Predicated region
    $region9: #{image_downsampler.3} parent=5 // pred_check
      _
    $region10: #{image_downsampler.3} parent=5 // pred_check_branch
      %160 = sbr.rel (%p157) target = $region12
    $region11: #{image_downsampler.3} parent=5 // pred_region
      %s161 = ssub.s32 %s11, 1
      // Predicated region
      $region13: #{image_downsampler.3} parent=11 // pred_check
        %p162 = pneg %p58
      $region14: #{image_downsampler.3} parent=11 // pred_check_branch
        %164 = sbr.rel (%p162) target = $region16
      $region15: #{image_downsampler.3} parent=11 // pred_region
        _
      $region16: #{image_downsampler.3} parent=11 // pred_fallthru
        _
      // Predicated region
      $region17: #{image_downsampler.3} parent=11 // pred_check
        %p165 = pneg %p79
      $region18: #{image_downsampler.3} parent=11 // pred_check_branch
        %167 = sbr.rel (%p165) target = $region20
      $region19: #{image_downsampler.3} parent=11 // pred_region
        _
      $region20: #{image_downsampler.3} parent=11 // pred_fallthru
        _
      // Predicated region
      $region21: #{image_downsampler.3} parent=11 // pred_check
        %p168 = pneg %p100
      $region22: #{image_downsampler.3} parent=11 // pred_check_branch
        %170 = sbr.rel (%p168) target = $region24
      $region23: #{image_downsampler.3} parent=11 // pred_region
        _
      $region24: #{image_downsampler.3} parent=11 // pred_fallthru
        _
      // Predicated region
      $region25: #{image_downsampler.3} parent=11 // pred_check
        %p171 = pneg %p121
      $region26: #{image_downsampler.3} parent=11 // pred_check_branch
        %173 = sbr.rel (%p171) target = $region28
      $region27: #{image_downsampler.3} parent=11 // pred_region
        _
      $region28: #{image_downsampler.3} parent=11 // pred_fallthru
        _
    $region12: #{image_downsampler.3} parent=5 // pred_fallthru
      _
    %p174 = scmp.lt.s32.totalorder %s11, 2
    // Predicated region
    $region29: #{image_downsampler.3} parent=5 // pred_check
      %p175 = pneg %p174
    $region30: #{image_downsampler.3} parent=5 // pred_check_branch
      %177 = sbr.rel (%p175) target = $region32
    $region31: #{image_downsampler.3} parent=5 // pred_region
      // Predicated region
      $region33: #{image_downsampler.3} parent=31 // pred_check
        %p178 = pneg %p31
      $region34: #{image_downsampler.3} parent=31 // pred_check_branch
        %180 = sbr.rel (%p178) target = $region36
      $region35: #{image_downsampler.3} parent=31 // pred_region
        %p181 = scmp.lt.s32.totalorder %s11, 1
        %s182 = scalar_select %p181, %s11, 1
        %s183 = smul.addr %s182, 18
        %s184 = smul.addr %s183, 4
        %s185 = scalar_lea.vmem %s0, %s184
      $region36: #{image_downsampler.3} parent=31 // pred_fallthru
        _
    $region32: #{image_downsampler.3} parent=5 // pred_fallthru
      _
    %p186 = scmp.le.s32.totalorder 1, %s11
    %p187 = scmp.lt.s32.totalorder %s11, 3
    %p188 = pnand %p186, %p187
    %p189 = pneg %p188
    // Predicated region
    $region37: #{image_downsampler.3} parent=5 // pred_check
      _
    $region38: #{image_downsampler.3} parent=5 // pred_check_branch
      %191 = sbr.rel (%p188) target = $region40
    $region39: #{image_downsampler.3} parent=5 // pred_region
      %s192 = ssub.s32 %s11, 1
      %p193 = scmp.lt.s32.totalorder %s16, 1
      %s194 = scalar_select %p193, %s16, 1
      %s195 = smul.addr %s194, 18
      %s196 = smul.addr %s195, 4
      %s197 = scalar_lea.vmem %s0, %s196
      %p198 = pneg %p37
      %p199 = pneg %p34
      %p200 = pneg %p58
      %p201 = pneg %p55
      %p202 = pneg %p79
      %p203 = pneg %p76
      %p204 = pneg %p100
      %p205 = pneg %p97
      %p206 = pneg %p121
      %p207 = pneg %p118
      %p208 = pneg %p147
      %p209 = pneg %p144
      %p210 = scmp.lt.s32.totalorder %s16, 1
      %s211 = scalar_select %p210, %s16, 1
      %s212 = smul.addr %s211, 4
      %s213 = smul.addr %s212, 8
      %s214 = scalar_lea.vmem %s5, %s213
      %p215 = scmp.lt.s32.totalorder %s16, 1
      %s216 = scalar_select %p215, %s16, 1
      %s217 = smul.addr %s216, 18
      %s218 = smul.addr %s217, 4
      %s219 = scalar_lea.vmem %s0, %s218
      %p220 = scmp.lt.s32.totalorder %s16, 1
      %s221 = scalar_select %p220, %s16, 1
      %s222 = smul.addr %s221, 4
      %s223 = smul.addr %s222, 8
      %s224 = scalar_lea.vmem %s5, %s223
      %v226 = vld [vmem:[%s1] sm:$0xff]
      %v227 = vld [vmem:[%s1 + $0x8] sm:$0xff]
      %v228 = vld [vmem:[%s1 + $0x10] sm:$0xff]
      %v229 = vld [vmem:[%s1 + $0x18] sm:$0xff]
      %v230 = vld [vmem:[%s219] sm:$0xf]
      %v231 = vld [vmem:[%s219 + $0x4] sm:$0xf]
      %v232 = vld [vmem:[%s219 + $0x8] sm:$0xf]
      %v233 = vld [vmem:[%s219 + $0xc] sm:$0xf]
      %v234 = vld [vmem:[%s219 + $0x10] sm:$0xf]
      %v235 = vld [vmem:[%s219 + $0x14] sm:$0xf]
      %v236 = vld [vmem:[%s219 + $0x18] sm:$0xf]
      %v237 = vld [vmem:[%s219 + $0x1c] sm:$0xf]
      %v238 = vld [vmem:[%s219 + $0x20] sm:$0xf]
      %v239 = vld [vmem:[%s219 + $0x24] sm:$0xf]
      %v240 = vld [vmem:[%s219 + $0x28] sm:$0xf]
      %v241 = vld [vmem:[%s219 + $0x2c] sm:$0xf]
      %v242 = vld [vmem:[%s219 + $0x30] sm:$0xf]
      %v243 = vld [vmem:[%s219 + $0x34] sm:$0xf]
      %v244 = vld [vmem:[%s219 + $0x38] sm:$0xf]
      %v245 = vld [vmem:[%s219 + $0x3c] sm:$0xf]
      %v246 = vld [vmem:[%s219 + $0x40] sm:$0xf]
      %v247 = vld [vmem:[%s219 + $0x44] sm:$0xf]
      %v248 = vld [vmem:[%s2] sm:$0xff]
      %v249 = vld [vmem:[%s2 + $0x8] sm:$0xff]
      %v250 = vld [vmem:[%s2 + $0x10] sm:$0xff]
      %v251 = vld [vmem:[%s2 + $0x18] sm:$0xff]
      %253 = vset.pattern.permute.xlu0 0
      %254 = vperm.xlu0 %253, %v248
      %v255 = vpop.permute.xlu0 %254
      %258 = vset.pattern.permute.xlu0 0
      %259 = vperm.xlu0 %258, %v249
      %v260 = vpop.permute.xlu0 %259
      %263 = vset.pattern.permute.xlu0 0
      %264 = vperm.xlu0 %263, %v250
      %v265 = vpop.permute.xlu0 %264
      %268 = vset.pattern.permute.xlu0 0
      %269 = vperm.xlu0 %268, %v251
      %v270 = vpop.permute.xlu0 %269
      %v276 = vunpack.c.l.b16 %v226
      %v277 = vunpack.c.h.b16 %v226
      %v278 = vunpack.c.l.b16 %v227
      %v279 = vunpack.c.h.b16 %v227
      %v280 = vunpack.c.l.b16 %v228
      %v281 = vunpack.c.h.b16 %v228
      %v282 = vunpack.c.l.b16 %v229
      %v283 = vunpack.c.h.b16 %v229
      %v284 = vpack.c.b16 %v278, %v276
      %v285 = vpack.c.b16 %v279, %v277
      %v286 = vpack.c.b16 %v282, %v280
      %v287 = vpack.c.b16 %v283, %v281
      %v308 = vunpack.c.l.b16 %v230
      %v309 = vunpack.c.l.b16 %v231
      %v310 = vunpack.c.l.b16 %v232
      %v311 = vunpack.c.l.b16 %v233
      %v312 = vunpack.c.l.b16 %v234
      %v313 = vunpack.c.l.b16 %v235
      %v314 = vunpack.c.l.b16 %v236
      %v315 = vunpack.c.l.b16 %v237
      %v316 = vunpack.c.l.b16 %v238
      %v317 = vunpack.c.l.b16 %v239
      %v318 = vunpack.c.l.b16 %v240
      %v319 = vunpack.c.l.b16 %v241
      %v320 = vunpack.c.l.b16 %v242
      %v321 = vunpack.c.l.b16 %v243
      %v322 = vunpack.c.l.b16 %v244
      %v323 = vunpack.c.l.b16 %v245
      %v324 = vunpack.c.l.b16 %v246
      %v325 = vunpack.c.l.b16 %v247
      %v326 = vpack.c.b16 %v309, %v308
      %v327 = vpack.c.b16 %v311, %v310
      %v328 = vpack.c.b16 %v313, %v312
      %v329 = vpack.c.b16 %v315, %v314
      %v330 = vpack.c.b16 %v317, %v316
      %v331 = vpack.c.b16 %v319, %v318
      %v332 = vpack.c.b16 %v321, %v320
      %v333 = vpack.c.b16 %v323, %v322
      %v334 = vpack.c.b16 %v325, %v324
      %vm344 = vcmask 130048
      %v346 = vsel %vm344, %v285, 0
      %v349 = vsel %vm344, %v287, 0
      %351 = vmatpush.bf16.msra.mxu0 %v333
      %352 = vmatpush.bf16.msra.mxu0 %v332
      %353 = vmatpush.bf16.msra.mxu0 %v331
      %354 = vmatpush.bf16.msra.mxu0 %v330
      %355 = vmatpush.bf16.msra.mxu0 %v329
      %356 = vmatpush.bf16.msra.mxu0 %v328
      %357 = vmatpush.bf16.msra.mxu0 %v327
      %358 = vmatpush.bf16.msra.mxu0 %v326
      %359 = vmatmul.bf16.gmra.mxu0 %v284
      %v360 = vpop.f32.mrf.mxu0
      %v361 = vadd.f32 %v255, %v360
      %v362 = vpop.f32.mrf.mxu0
      %v363 = vadd.f32 %v260, %v362
      %364 = vmatmul.bf16.gmra.mxu0 %v286
      %v365 = vpop.f32.mrf.mxu0
      %v366 = vadd.f32 %v265, %v365
      %v367 = vpop.f32.mrf.mxu0
      %v368 = vadd.f32 %v270, %v367
      %369 = vdwg.mxu0
      %370 = vmatpush.bf16.msra.mxu0 0
      %371 = vmatpush.bf16.msra.mxu0 0
      %372 = vmatpush.bf16.msra.mxu0 0
      %373 = vmatpush.bf16.msra.mxu0 0
      %374 = vmatpush.bf16.msra.mxu0 0
      %375 = vmatpush.bf16.msra.mxu0 0
      %376 = vmatpush.bf16.msra.mxu0 0
      %377 = vmatpush.bf16.msra.mxu0 %v334
      %378 = vmatmul.bf16.gmra.mxu0 %v346
      %v379 = vpop.f32.mrf.mxu0
      %v380 = vadd.f32 %v361, %v379
      %v381 = vpop.f32.mrf.mxu0
      %v382 = vadd.f32 %v363, %v381
      %383 = vmatmul.bf16.gmra.mxu0 %v349
      %v384 = vpop.f32.mrf.mxu0
      %v385 = vadd.f32 %v366, %v384
      %v386 = vpop.f32.mrf.mxu0
      %v387 = vadd.f32 %v368, %v386
      %388 = vdwg.mxu0
      %v393 = vrot.slane %v380, 4
      %v394 = vrot.slane %v382, 4
      %v395 = vrot.slane %v385, 4
      %v396 = vrot.slane %v387, 4
      %vm401 = vcmask 519168
      %v402 = vsel %vm401, %v380, 0.0
      %403 = vadd.xlane.f32.xlu0 %v402
      %v404 = vpop.xlane.xlu0 %403
      %v405 = vsel %vm401, %v393, 0.0
      %406 = vadd.xlane.f32.xlu0 %v405
      %v407 = vpop.xlane.xlu0 %406
      %v408 = vsel %vm401, %v382, 0.0
      %409 = vadd.xlane.f32.xlu0 %v408
      %v410 = vpop.xlane.xlu0 %409
      %v411 = vsel %vm401, %v394, 0.0
      %412 = vadd.xlane.f32.xlu0 %v411
      %v413 = vpop.xlane.xlu0 %412
      %v414 = vsel %vm401, %v385, 0.0
      %415 = vadd.xlane.f32.xlu0 %v414
      %v416 = vpop.xlane.xlu0 %415
      %v417 = vsel %vm401, %v395, 0.0
      %418 = vadd.xlane.f32.xlu0 %v417
      %v419 = vpop.xlane.xlu0 %418
      %v420 = vsel %vm401, %v387, 0.0
      %421 = vadd.xlane.f32.xlu0 %v420
      %v422 = vpop.xlane.xlu0 %421
      %v423 = vsel %vm401, %v396, 0.0
      %424 = vadd.xlane.f32.xlu0 %v423
      %v425 = vpop.xlane.xlu0 %424
      %vm426 = vcmask 1043456
      %v427 = vsel %vm426, %v404, 0.0
      %v428 = vrot.slane %v427, 4
      %v429 = vadd.f32 %v427, %v428
      %v430 = vrot.slane %v429, 2
      %v431 = vadd.f32 %v429, %v430
      %v432 = vrot.slane %v431, 1
      %v433 = vadd.f32 %v431, %v432
      %v434 = vsel %vm426, %v407, 0.0
      %v435 = vrot.slane %v434, 4
      %v436 = vadd.f32 %v434, %v435
      %v437 = vrot.slane %v436, 2
      %v438 = vadd.f32 %v436, %v437
      %v439 = vrot.slane %v438, 1
      %v440 = vadd.f32 %v438, %v439
      %v441 = vsel %vm426, %v410, 0.0
      %v442 = vrot.slane %v441, 4
      %v443 = vadd.f32 %v441, %v442
      %v444 = vrot.slane %v443, 2
      %v445 = vadd.f32 %v443, %v444
      %v446 = vrot.slane %v445, 1
      %v447 = vadd.f32 %v445, %v446
      %v448 = vsel %vm426, %v413, 0.0
      %v449 = vrot.slane %v448, 4
      %v450 = vadd.f32 %v448, %v449
      %v451 = vrot.slane %v450, 2
      %v452 = vadd.f32 %v450, %v451
      %v453 = vrot.slane %v452, 1
      %v454 = vadd.f32 %v452, %v453
      %v455 = vsel %vm426, %v416, 0.0
      %v456 = vrot.slane %v455, 4
      %v457 = vadd.f32 %v455, %v456
      %v458 = vrot.slane %v457, 2
      %v459 = vadd.f32 %v457, %v458
      %v460 = vrot.slane %v459, 1
      %v461 = vadd.f32 %v459, %v460
      %v462 = vsel %vm426, %v419, 0.0
      %v463 = vrot.slane %v462, 4
      %v464 = vadd.f32 %v462, %v463
      %v465 = vrot.slane %v464, 2
      %v466 = vadd.f32 %v464, %v465
      %v467 = vrot.slane %v466, 1
      %v468 = vadd.f32 %v466, %v467
      %v469 = vsel %vm426, %v422, 0.0
      %v470 = vrot.slane %v469, 4
      %v471 = vadd.f32 %v469, %v470
      %v472 = vrot.slane %v471, 2
      %v473 = vadd.f32 %v471, %v472
      %v474 = vrot.slane %v473, 1
      %v475 = vadd.f32 %v473, %v474
      %v476 = vsel %vm426, %v425, 0.0
      %v477 = vrot.slane %v476, 4
      %v478 = vadd.f32 %v476, %v477
      %v479 = vrot.slane %v478, 2
      %v480 = vadd.f32 %v478, %v479
      %v481 = vrot.slane %v480, 1
      %v482 = vadd.f32 %v480, %v481
      %v483 = vmul.f32 %v433, 0.00390625
      %v484 = vmul.f32 %v440, 0.00390625
      %v485 = vmul.f32 %v447, 0.00390625
      %v486 = vmul.f32 %v454, 0.00390625
      %v487 = vmul.f32 %v461, 0.00390625
      %v488 = vmul.f32 %v468, 0.00390625
      %v489 = vmul.f32 %v475, 0.00390625
      %v490 = vmul.f32 %v482, 0.00390625
      %v491 = vsub.f32 %v380, %v483
      %v492 = vsub.f32 %v393, %v484
      %v493 = vsub.f32 %v382, %v485
      %v494 = vsub.f32 %v394, %v486
      %v495 = vsub.f32 %v385, %v487
      %v496 = vsub.f32 %v395, %v488
      %v497 = vsub.f32 %v387, %v489
      %v498 = vsub.f32 %v396, %v490
      %v499 = vmul.f32 %v491, %v491
      %v500 = vmul.f32 %v492, %v492
      %v501 = vmul.f32 %v493, %v493
      %v502 = vmul.f32 %v494, %v494
      %v503 = vmul.f32 %v495, %v495
      %v504 = vmul.f32 %v496, %v496
      %v505 = vmul.f32 %v497, %v497
      %v506 = vmul.f32 %v498, %v498
      %v507 = vsel %vm401, %v499, 0.0
      %508 = vadd.xlane.f32.xlu0 %v507
      %v509 = vpop.xlane.xlu0 %508
      %v510 = vsel %vm401, %v500, 0.0
      %511 = vadd.xlane.f32.xlu0 %v510
      %v512 = vpop.xlane.xlu0 %511
      %v513 = vsel %vm401, %v501, 0.0
      %514 = vadd.xlane.f32.xlu0 %v513
      %v515 = vpop.xlane.xlu0 %514
      %v516 = vsel %vm401, %v502, 0.0
      %517 = vadd.xlane.f32.xlu0 %v516
      %v518 = vpop.xlane.xlu0 %517
      %v519 = vsel %vm401, %v503, 0.0
      %520 = vadd.xlane.f32.xlu0 %v519
      %v521 = vpop.xlane.xlu0 %520
      %v522 = vsel %vm401, %v504, 0.0
      %523 = vadd.xlane.f32.xlu0 %v522
      %v524 = vpop.xlane.xlu0 %523
      %v525 = vsel %vm401, %v505, 0.0
      %526 = vadd.xlane.f32.xlu0 %v525
      %v527 = vpop.xlane.xlu0 %526
      %v528 = vsel %vm401, %v506, 0.0
      %529 = vadd.xlane.f32.xlu0 %v528
      %v530 = vpop.xlane.xlu0 %529
      %v531 = vsel %vm426, %v509, 0.0
      %v532 = vrot.slane %v531, 4
      %v533 = vadd.f32 %v531, %v532
      %v534 = vrot.slane %v533, 2
      %v535 = vadd.f32 %v533, %v534
      %v536 = vrot.slane %v535, 1
      %v537 = vadd.f32 %v535, %v536
      %v538 = vsel %vm426, %v512, 0.0
      %v539 = vrot.slane %v538, 4
      %v540 = vadd.f32 %v538, %v539
      %v541 = vrot.slane %v540, 2
      %v542 = vadd.f32 %v540, %v541
      %v543 = vrot.slane %v542, 1
      %v544 = vadd.f32 %v542, %v543
      %v545 = vsel %vm426, %v515, 0.0
      %v546 = vrot.slane %v545, 4
      %v547 = vadd.f32 %v545, %v546
      %v548 = vrot.slane %v547, 2
      %v549 = vadd.f32 %v547, %v548
      %v550 = vrot.slane %v549, 1
      %v551 = vadd.f32 %v549, %v550
      %v552 = vsel %vm426, %v518, 0.0
      %v553 = vrot.slane %v552, 4
      %v554 = vadd.f32 %v552, %v553
      %v555 = vrot.slane %v554, 2
      %v556 = vadd.f32 %v554, %v555
      %v557 = vrot.slane %v556, 1
      %v558 = vadd.f32 %v556, %v557
      %v559 = vsel %vm426, %v521, 0.0
      %v560 = vrot.slane %v559, 4
      %v561 = vadd.f32 %v559, %v560
      %v562 = vrot.slane %v561, 2
      %v563 = vadd.f32 %v561, %v562
      %v564 = vrot.slane %v563, 1
      %v565 = vadd.f32 %v563, %v564
      %v566 = vsel %vm426, %v524, 0.0
      %v567 = vrot.slane %v566, 4
      %v568 = vadd.f32 %v566, %v567
      %v569 = vrot.slane %v568, 2
      %v570 = vadd.f32 %v568, %v569
      %v571 = vrot.slane %v570, 1
      %v572 = vadd.f32 %v570, %v571
      %v573 = vsel %vm426, %v527, 0.0
      %v574 = vrot.slane %v573, 4
      %v575 = vadd.f32 %v573, %v574
      %v576 = vrot.slane %v575, 2
      %v577 = vadd.f32 %v575, %v576
      %v578 = vrot.slane %v577, 1
      %v579 = vadd.f32 %v577, %v578
      %v580 = vsel %vm426, %v530, 0.0
      %v581 = vrot.slane %v580, 4
      %v582 = vadd.f32 %v580, %v581
      %v583 = vrot.slane %v582, 2
      %v584 = vadd.f32 %v582, %v583
      %v585 = vrot.slane %v584, 1
      %v586 = vadd.f32 %v584, %v585
      %v587 = vmul.f32 %v537, 0.00390625
      %v588 = vmul.f32 %v544, 0.00390625
      %v589 = vmul.f32 %v551, 0.00390625
      %v590 = vmul.f32 %v558, 0.00390625
      %v591 = vmul.f32 %v565, 0.00390625
      %v592 = vmul.f32 %v572, 0.00390625
      %v593 = vmul.f32 %v579, 0.00390625
      %v594 = vmul.f32 %v586, 0.00390625
      %v595 = vadd.f32 %v587, 1e-05
      %v596 = vadd.f32 %v588, 1e-05
      %v597 = vadd.f32 %v589, 1e-05
      %v598 = vadd.f32 %v590, 1e-05
      %v599 = vadd.f32 %v591, 1e-05
      %v600 = vadd.f32 %v592, 1e-05
      %v601 = vadd.f32 %v593, 1e-05
      %v602 = vadd.f32 %v594, 1e-05
      %v603 = vrsqrt.pop %v595
      %v604 = vmul.f32 %v603, %v595
      %v605 = vmul.f32 %v604, %v603
      %v606 = vmul.f32 0.5, %v605
      %v607 = vsub.f32 1.5, %v606
      %v608 = vmul.f32 %v603, %v607
      %vm609 = vweird.f32 %v595
      %vm610 = vweird.f32 %v603
      %vm611 = vmor %vm609, %vm610
      %v612 = vsel %vm611, %v603, %v608
      %v613 = vrsqrt.pop %v596
      %v614 = vmul.f32 %v613, %v596
      %v615 = vmul.f32 %v614, %v613
      %v616 = vmul.f32 0.5, %v615
      %v617 = vsub.f32 1.5, %v616
      %v618 = vmul.f32 %v613, %v617
      %vm619 = vweird.f32 %v596
      %vm620 = vweird.f32 %v613
      %vm621 = vmor %vm619, %vm620
      %v622 = vsel %vm621, %v613, %v618
      %v623 = vrsqrt.pop %v597
      %v624 = vmul.f32 %v623, %v597
      %v625 = vmul.f32 %v624, %v623
      %v626 = vmul.f32 0.5, %v625
      %v627 = vsub.f32 1.5, %v626
      %v628 = vmul.f32 %v623, %v627
      %vm629 = vweird.f32 %v597
      %vm630 = vweird.f32 %v623
      %vm631 = vmor %vm629, %vm630
      %v632 = vsel %vm631, %v623, %v628
      %v633 = vrsqrt.pop %v598
      %v634 = vmul.f32 %v633, %v598
      %v635 = vmul.f32 %v634, %v633
      %v636 = vmul.f32 0.5, %v635
      %v637 = vsub.f32 1.5, %v636
      %v638 = vmul.f32 %v633, %v637
      %vm639 = vweird.f32 %v598
      %vm640 = vweird.f32 %v633
      %vm641 = vmor %vm639, %vm640
      %v642 = vsel %vm641, %v633, %v638
      %v643 = vrsqrt.pop %v599
      %v644 = vmul.f32 %v643, %v599
      %v645 = vmul.f32 %v644, %v643
      %v646 = vmul.f32 0.5, %v645
      %v647 = vsub.f32 1.5, %v646
      %v648 = vmul.f32 %v643, %v647
      %vm649 = vweird.f32 %v599
      %vm650 = vweird.f32 %v643
      %vm651 = vmor %vm649, %vm650
      %v652 = vsel %vm651, %v643, %v648
      %v653 = vrsqrt.pop %v600
      %v654 = vmul.f32 %v653, %v600
      %v655 = vmul.f32 %v654, %v653
      %v656 = vmul.f32 0.5, %v655
      %v657 = vsub.f32 1.5, %v656
      %v658 = vmul.f32 %v653, %v657
      %vm659 = vweird.f32 %v600
      %vm660 = vweird.f32 %v653
      %vm661 = vmor %vm659, %vm660
      %v662 = vsel %vm661, %v653, %v658
      %v663 = vrsqrt.pop %v601
      %v664 = vmul.f32 %v663, %v601
      %v665 = vmul.f32 %v664, %v663
      %v666 = vmul.f32 0.5, %v665
      %v667 = vsub.f32 1.5, %v666
      %v668 = vmul.f32 %v663, %v667
      %vm669 = vweird.f32 %v601
      %vm670 = vweird.f32 %v663
      %vm671 = vmor %vm669, %vm670
      %v672 = vsel %vm671, %v663, %v668
      %v673 = vrsqrt.pop %v602
      %v674 = vmul.f32 %v673, %v602
      %v675 = vmul.f32 %v674, %v673
      %v676 = vmul.f32 0.5, %v675
      %v677 = vsub.f32 1.5, %v676
      %v678 = vmul.f32 %v673, %v677
      %vm679 = vweird.f32 %v602
      %vm680 = vweird.f32 %v673
      %vm681 = vmor %vm679, %vm680
      %v682 = vsel %vm681, %v673, %v678
      %v683 = vmul.f32 %v491, %v612
      %v684 = vmul.f32 %v492, %v622
      %v685 = vmul.f32 %v493, %v632
      %v686 = vmul.f32 %v494, %v642
      %v687 = vmul.f32 %v495, %v652
      %v688 = vmul.f32 %v496, %v662
      %v689 = vmul.f32 %v497, %v672
      %v690 = vmul.f32 %v498, %v682
      %v691 = vld [vmem:[%s3] sm:$0xff]
      %v692 = vld [vmem:[%s3 + $0x8] sm:$0xff]
      %v693 = vld [vmem:[%s3 + $0x10] sm:$0xff]
      %v694 = vld [vmem:[%s3 + $0x18] sm:$0xff]
      %696 = vset.pattern.permute.xlu0 0
      %697 = vperm.xlu0 %696, %v691
      %v698 = vpop.permute.xlu0 %697
      %700 = vset.pattern.permute.xlu0 0
      %701 = vperm.xlu0 %700, %v692
      %v702 = vpop.permute.xlu0 %701
      %704 = vset.pattern.permute.xlu0 0
      %705 = vperm.xlu0 %704, %v693
      %v706 = vpop.permute.xlu0 %705
      %708 = vset.pattern.permute.xlu0 0
      %709 = vperm.xlu0 %708, %v694
      %v710 = vpop.permute.xlu0 %709
      %v712 = vunpack.c.l.s4 839922192
      %v713 = vunpack.c.0.s8 %v712
      %v714 = vperm.slane %v698, %v713
      %v716 = vunpack.c.l.s4 1985246804
      %v717 = vunpack.c.0.s8 %v716
      %v718 = vperm.slane %v698, %v717
      %v720 = vunpack.c.l.s4 839922192
      %v721 = vunpack.c.0.s8 %v720
      %v722 = vperm.slane %v702, %v721
      %v724 = vunpack.c.l.s4 1985246804
      %v725 = vunpack.c.0.s8 %v724
      %v726 = vperm.slane %v702, %v725
      %v728 = vunpack.c.l.s4 839922192
      %v729 = vunpack.c.0.s8 %v728
      %v730 = vperm.slane %v706, %v729
      %v732 = vunpack.c.l.s4 1985246804
      %v733 = vunpack.c.0.s8 %v732
      %v734 = vperm.slane %v706, %v733
      %v736 = vunpack.c.l.s4 839922192
      %v737 = vunpack.c.0.s8 %v736
      %v738 = vperm.slane %v710, %v737
      %v740 = vunpack.c.l.s4 1985246804
      %v741 = vunpack.c.0.s8 %v740
      %v742 = vperm.slane %v710, %v741
      %v751 = vmul.f32 %v683, %v714
      %v752 = vmul.f32 %v684, %v718
      %v753 = vmul.f32 %v685, %v722
      %v754 = vmul.f32 %v686, %v726
      %v755 = vmul.f32 %v687, %v730
      %v756 = vmul.f32 %v688, %v734
      %v757 = vmul.f32 %v689, %v738
      %v758 = vmul.f32 %v690, %v742
      %v759 = vld [vmem:[%s4] sm:$0xff]
      %v760 = vld [vmem:[%s4 + $0x8] sm:$0xff]
      %v761 = vld [vmem:[%s4 + $0x10] sm:$0xff]
      %v762 = vld [vmem:[%s4 + $0x18] sm:$0xff]
      %764 = vset.pattern.permute.xlu0 0
      %765 = vperm.xlu0 %764, %v759
      %v766 = vpop.permute.xlu0 %765
      %768 = vset.pattern.permute.xlu0 0
      %769 = vperm.xlu0 %768, %v760
      %v770 = vpop.permute.xlu0 %769
      %772 = vset.pattern.permute.xlu0 0
      %773 = vperm.xlu0 %772, %v761
      %v774 = vpop.permute.xlu0 %773
      %776 = vset.pattern.permute.xlu0 0
      %777 = vperm.xlu0 %776, %v762
      %v778 = vpop.permute.xlu0 %777
      %v780 = vunpack.c.l.s4 839922192
      %v781 = vunpack.c.0.s8 %v780
      %v782 = vperm.slane %v766, %v781
      %v784 = vunpack.c.l.s4 1985246804
      %v785 = vunpack.c.0.s8 %v784
      %v786 = vperm.slane %v766, %v785
      %v788 = vunpack.c.l.s4 839922192
      %v789 = vunpack.c.0.s8 %v788
      %v790 = vperm.slane %v770, %v789
      %v792 = vunpack.c.l.s4 1985246804
      %v793 = vunpack.c.0.s8 %v792
      %v794 = vperm.slane %v770, %v793
      %v796 = vunpack.c.l.s4 839922192
      %v797 = vunpack.c.0.s8 %v796
      %v798 = vperm.slane %v774, %v797
      %v800 = vunpack.c.l.s4 1985246804
      %v801 = vunpack.c.0.s8 %v800
      %v802 = vperm.slane %v774, %v801
      %v804 = vunpack.c.l.s4 839922192
      %v805 = vunpack.c.0.s8 %v804
      %v806 = vperm.slane %v778, %v805
      %v808 = vunpack.c.l.s4 1985246804
      %v809 = vunpack.c.0.s8 %v808
      %v810 = vperm.slane %v778, %v809
      %v819 = vadd.f32 %v751, %v782
      %v820 = vadd.f32 %v752, %v786
      %v821 = vadd.f32 %v753, %v790
      %v822 = vadd.f32 %v754, %v794
      %v823 = vadd.f32 %v755, %v798
      %v824 = vadd.f32 %v756, %v802
      %v825 = vadd.f32 %v757, %v806
      %v826 = vadd.f32 %v758, %v810
      %v827 = vsub.f32 0.0, %v819
      %v828 = vsub.f32 0.0, %v820
      %v829 = vsub.f32 0.0, %v821
      %v830 = vsub.f32 0.0, %v822
      %v831 = vsub.f32 0.0, %v823
      %v832 = vsub.f32 0.0, %v824
      %v833 = vsub.f32 0.0, %v825
      %v834 = vsub.f32 0.0, %v826
      %v835 = vmul.f32 %v827, 1.442695
      %v836 = vpow.pop %v835
      %v837 = vmul.f32 %v828, 1.442695
      %v838 = vpow.pop %v837
      %v839 = vmul.f32 %v829, 1.442695
      %v840 = vpow.pop %v839
      %v841 = vmul.f32 %v830, 1.442695
      %v842 = vpow.pop %v841
      %v843 = vmul.f32 %v831, 1.442695
      %v844 = vpow.pop %v843
      %v845 = vmul.f32 %v832, 1.442695
      %v846 = vpow.pop %v845
      %v847 = vmul.f32 %v833, 1.442695
      %v848 = vpow.pop %v847
      %v849 = vmul.f32 %v834, 1.442695
      %v850 = vpow.pop %v849
      %v851 = vadd.f32 %v836, 1.0
      %v852 = vadd.f32 %v838, 1.0
      %v853 = vadd.f32 %v840, 1.0
      %v854 = vadd.f32 %v842, 1.0
      %v855 = vadd.f32 %v844, 1.0
      %v856 = vadd.f32 %v846, 1.0
      %v857 = vadd.f32 %v848, 1.0
      %v858 = vadd.f32 %v850, 1.0
      %v859 = vrcp.pop %v851
      %v860 = vrcp.pop %v852
      %v861 = vrcp.pop %v853
      %v862 = vrcp.pop %v854
      %v863 = vrcp.pop %v855
      %v864 = vrcp.pop %v856
      %v865 = vrcp.pop %v857
      %v866 = vrcp.pop %v858
      %v867 = vmul.f32 %v819, %v859
      %v868 = vmul.f32 %v820, %v860
      %v869 = vmul.f32 %v821, %v861
      %v870 = vmul.f32 %v822, %v862
      %v871 = vmul.f32 %v823, %v863
      %v872 = vmul.f32 %v824, %v864
      %v873 = vmul.f32 %v825, %v865
      %v874 = vmul.f32 %v826, %v866
      %883 = vst [vmem:[#allocation1] ss:$2 sm:$0xff] %v867
      %s884 = scalar_lea.vmem [#allocation1], 1
      %885 = vst [vmem:[%s884] ss:$2 sm:$0xff] %v868
      %s886 = scalar_lea.vmem [#allocation1], 16
      %887 = vst [vmem:[%s886] ss:$2 sm:$0xff] %v869
      %s888 = scalar_lea.vmem [#allocation1], 17
      %889 = vst [vmem:[%s888] ss:$2 sm:$0xff] %v870
      %s890 = scalar_lea.vmem [#allocation1], 32
      %891 = vst [vmem:[%s890] ss:$2 sm:$0xff] %v871
      %s892 = scalar_lea.vmem [#allocation1], 33
      %893 = vst [vmem:[%s892] ss:$2 sm:$0xff] %v872
      %s894 = scalar_lea.vmem [#allocation1], 48
      %895 = vst [vmem:[%s894] ss:$2 sm:$0xff] %v873
      %s896 = scalar_lea.vmem [#allocation1], 49
      %897 = vst [vmem:[%s896] ss:$2 sm:$0xff] %v874
      %v898 = vld.sshfl [vmem:[#allocation1] sm:$0xff pattern:$0x75316420]
      %v899 = vld.sshfl [vmem:[#allocation1 + $0x10] sm:$0xff pattern:$0x75316420]
      %v900 = vld.sshfl [vmem:[#allocation1 + $0x20] sm:$0xff pattern:$0x75316420]
      %v901 = vld.sshfl [vmem:[#allocation1 + $0x30] sm:$0xff pattern:$0x75316420]
      %vm906 = vcmask 523264
      %907 = vst.msk [vmem:[%s224] sm:$0xff] %vm906, %v898
      %908 = vst.msk [vmem:[%s224 + $0x8] sm:$0xff] %vm906, %v899
      %909 = vst.msk [vmem:[%s224 + $0x10] sm:$0xff] %vm906, %v900
      %910 = vst.msk [vmem:[%s224 + $0x18] sm:$0xff] %vm906, %v901
      %p911 = scmp.lt.s32.totalorder %s16, 1
      %s912 = scalar_select %p911, %s16, 1
      %s913 = smul.addr %s912, 4
      %s914 = smul.addr %s913, 8
      %s915 = scalar_lea.vmem %s5, %s914
      // Predicated region
      $region41: #{image_downsampler.3} parent=39 // pred_check
        %p916 = pneg %p144
      $region42: #{image_downsampler.3} parent=39 // pred_check_branch
        %918 = sbr.rel (%p916) target = $region44
      $region43: #{image_downsampler.3} parent=39 // pred_region
        _
      $region44: #{image_downsampler.3} parent=39 // pred_fallthru
        _
    $region40: #{image_downsampler.3} parent=5 // pred_fallthru
      _
    %p919 = scmp.le.s32.totalorder 2, %s11
    // Predicated region
    $region45: #{image_downsampler.3} parent=5 // pred_check
      %p920 = pneg %p919
    $region46: #{image_downsampler.3} parent=5 // pred_check_branch
      %922 = sbr.rel (%p920) target = $region48
    $region47: #{image_downsampler.3} parent=5 // pred_region
      %s923 = ssub.s32 %s11, 2
      // Predicated region
      $region49: #{image_downsampler.3} parent=47 // pred_check
        %p924 = pneg %p150
      $region50: #{image_downsampler.3} parent=47 // pred_check_branch
        %926 = sbr.rel (%p924) target = $region52
      $region51: #{image_downsampler.3} parent=47 // pred_region
        %p927 = scmp.lt.s32.totalorder %s17, 1
        %s928 = scalar_select %p927, %s17, 1
        %s929 = smul.addr %s928, 4
        %s930 = smul.addr %s929, 8
        %s931 = scalar_lea.vmem %s5, %s930
      $region52: #{image_downsampler.3} parent=47 // pred_fallthru
        _
    $region48: #{image_downsampler.3} parent=5 // pred_fallthru
      _
  $region6: #{image_downsampler.3} parent=0 // loop_footer
    %s15 = sadd.s32 1, %s11
  $region7: #{image_downsampler.3} parent=0 // loop_footer_branch
    %10 = sbr.rel target = $region3
  $region8: #{image_downsampler.3} parent=0 // loop_exit
    _

</llo_original>
